<compile_context>
chip_gen: v7x
topology: tpu7x:2x2x1
jax: 0.10.0
libtpu: 0.0.40
codegen_flags: <defaults>
</compile_context>

<pallas_src>
import jax
import jax.numpy as jnp
from jax.experimental import pallas as pl
from jax.experimental.pallas import tpu as pltpu


def _round_up(x, m):
    return ((x + m - 1) // m) * m


def _default_vmem_limit():
    try:
        info = pltpu.get_tpu_info()
        cap = getattr(info, "vmem_capacity_bytes", 128 * 1024 * 1024)
        return max(32 * 1024 * 1024, min(int(cap) * 3 // 4, 100 * 1024 * 1024))
    except Exception:
        return 32 * 1024 * 1024


def graph_laplacian_kernel(xT_ref, row_ref, col_lane_ref, col_sub_ref,
                           w1T_ref, b1_ref, w2_ref, b2_ref,
                           l_ref, deg_lane_acc, deg_row_acc):
    i = pl.program_id(0)                 # output row-tile (parallel)
    k = pl.program_id(1)                 # edge block (arbitrary / reduction)
    TN, Np = l_ref.shape
    D, TE = xT_ref.shape
    r0 = i * TN                          # first global node id of this row tile

    @pl.when(k == 0)
    def _init():
        l_ref[...] = jnp.zeros_like(l_ref)
        deg_lane_acc[...] = jnp.zeros_like(deg_lane_acc)
        deg_row_acc[...] = jnp.zeros_like(deg_row_acc)

    # ---- edge-weight MLP, transposed so edges are lane-dense --------------
    # Linear(D,32) -> ReLU -> Linear(32,1) -> Sigmoid, all per edge.
    xT = xT_ref[...]                                         # (D, TE)
    if D == 1:
        hT = w1T_ref[...] * xT                               # (H,1)*(1,TE) VPU
    else:
        hT = jnp.dot(w1T_ref[...], xT,
                     preferred_element_type=jnp.float32)     # (H, TE) MXU (tiny)
    hT = jnp.maximum(hT + b1_ref[...], 0.0)                  # (H, TE)
    # second Linear as multiply + sublane reduction (keeps the vmatmul slot free)
    wT = jnp.sum(hT * w2_ref[...], axis=0, keepdims=True) + b2_ref[...]
    wT = jax.nn.sigmoid(wT)                                  # (1, TE), EUP

    # bf16 hi/lo split of the edge weight: two bf16 matmuls ~ f32 accuracy.
    wT_hi = wT.astype(jnp.bfloat16).astype(jnp.float32)
    wT_lo = wT - wT_hi

    # ---- dense scatter replacement: one-hots + MXU contraction ------------
    row_ids = r0 + jax.lax.broadcasted_iota(jnp.int32, (TN, TE), 0)
    row_match = row_ref[...] == row_ids                      # (TN, TE) bool
    row_hi = jnp.where(row_match, wT_hi, 0.0).astype(jnp.bfloat16)   # exact
    row_lo = jnp.where(row_match, wT_lo, 0.0).astype(jnp.bfloat16)

    col_ids = jax.lax.broadcasted_iota(jnp.int32, (TE, Np), 1)
    col_match = col_sub_ref[...] == col_ids                  # (TE, Np) bool
    col_oh = col_match.astype(jnp.bfloat16)                  # exact 0/1

    dn = (((1,), (0,)), ((), ()))
    # A[i, j] += sum_e w_e * 1[row_e == i] * 1[col_e == j]  (duplicates summed)
    a = jax.lax.dot_general(row_hi, col_oh, dn,
                            preferred_element_type=jnp.float32)
    a = a + jax.lax.dot_general(row_lo, col_oh, dn,
                                preferred_element_type=jnp.float32)
    l_ref[...] += a                                          # resident output acc

    # ---- degree accumulation (VPU/XLU; hidden under the MXU contraction) --
    deg_lane_acc[...] += jnp.sum(col_match.astype(jnp.float32),
                                 axis=0, keepdims=True)      # deg[j], (1, Np)
    col_row_match = col_lane_ref[...] == row_ids             # (TN, TE) bool
    deg_row_acc[...] += jnp.sum(col_row_match.astype(jnp.float32),
                                axis=1, keepdims=True)       # deg[r0+i], (TN, 1)

    # ---- finalize: L = (I - diag(1/deg)) - D^-1/2 A D^-1/2 -----------------
    @pl.when(k == pl.num_programs(1) - 1)
    def _fin():
        dinv_lane = jax.lax.rsqrt(deg_lane_acc[...] + 1.0)   # (1, Np), deg >= 1
        dinv_row = jax.lax.rsqrt(deg_row_acc[...] + 1.0)     # (TN, 1)
        adj = (l_ref[...] * dinv_lane) * dinv_row            # pure VPU scaling
        ri = r0 + jax.lax.broadcasted_iota(jnp.int32, (TN, Np), 0)
        ci = jax.lax.broadcasted_iota(jnp.int32, (TN, Np), 1)
        diag_val = 1.0 - dinv_row * dinv_row                 # 1 - 1/deg[i]
        l_ref[...] = jnp.where(ri == ci, diag_val, 0.0) - adj


def graph_laplacian(edge_index, edge_attr, params, num_nodes, *,
                    edge_block=512, row_block=512, vmem_limit_bytes=None):
    w1, b1, w2, b2 = params
    E, D = edge_attr.shape
    H = w1.shape[1]

    # node axis: lane-dense, padded to a multiple of 128
    Np = _round_up(max(int(num_nodes), 1), 128)
    TN = min(_round_up(int(row_block), 128), Np)
    while Np % TN != 0:
        TN -= 128
    num_row_tiles = Np // TN

    # edge axis: contraction dim, multiple of 256 (MXU-native on v6e/v7x)
    TE = min(_round_up(int(edge_block), 256), _round_up(E, 256))
    E_pad = _round_up(E, TE)
    num_edge_blocks = E_pad // TE
    pad_e = E_pad - E

    # pad edges with sentinel index -1 (matches no node -> zero contribution)
    xT = jnp.pad(jnp.asarray(edge_attr, jnp.float32).T, ((0, 0), (0, pad_e)))
    row_lane = jnp.pad(edge_index[0].astype(jnp.int32), (0, pad_e),
                       constant_values=-1).reshape(1, E_pad)
    col_i = jnp.pad(edge_index[1].astype(jnp.int32), (0, pad_e),
                    constant_values=-1)
    col_lane = col_i.reshape(1, E_pad)
    col_sub = col_i.reshape(E_pad, 1)

    if vmem_limit_bytes is None:
        vmem_limit_bytes = _default_vmem_limit()

    grid_spec = pltpu.PrefetchScalarGridSpec(
        num_scalar_prefetch=0,
        grid=(num_row_tiles, num_edge_blocks),
        in_specs=[
            pl.BlockSpec((D, TE), lambda i, k: (0, k)),    # edge_attr^T tile
            pl.BlockSpec((1, TE), lambda i, k: (0, k)),    # row ids (lane-dense)
            pl.BlockSpec((1, TE), lambda i, k: (0, k)),    # col ids (lane-dense)
            pl.BlockSpec((TE, 1), lambda i, k: (k, 0)),    # col ids (sublane)
            pl.BlockSpec((H, D), lambda i, k: (0, 0)),     # w1^T (resident)
            pl.BlockSpec((H, 1), lambda i, k: (0, 0)),     # b1
            pl.BlockSpec((H, 1), lambda i, k: (0, 0)),     # w2
            pl.BlockSpec((1, 1), lambda i, k: (0, 0)),     # b2
        ],
        out_specs=pl.BlockSpec((TN, Np), lambda i, k: (i, 0)),
        scratch_shapes=[pltpu.VMEM((1, Np), jnp.float32),   # deg over columns
                        pltpu.VMEM((TN, 1), jnp.float32)],  # deg over tile rows
    )

    out = pl.pallas_call(
        graph_laplacian_kernel,
        out_shape=jax.ShapeDtypeStruct((Np, Np), jnp.float32),
        grid_spec=grid_spec,
        compiler_params=pltpu.CompilerParams(
            dimension_semantics=("parallel", "arbitrary"),
            vmem_limit_bytes=int(vmem_limit_bytes)),
    )(xT, row_lane, col_lane, col_sub,
      jnp.asarray(w1, jnp.float32).T,
      jnp.asarray(b1, jnp.float32).reshape(-1, 1),
      jnp.asarray(w2, jnp.float32).reshape(-1, 1),
      jnp.asarray(b2, jnp.float32).reshape(1, 1))

    return out[:num_nodes, :num_nodes]


def graph_laplacian_reference(edge_index, edge_attr, params, num_nodes):
    """Pure-JAX reference mirroring the PyTorch/PyG semantics exactly."""
    w1, b1, w2, b2 = params
    h = jnp.maximum(edge_attr @ w1 + b1, 0.0)
    w = jax.nn.sigmoid(h @ w2 + b2)[:, 0]
    loop = jnp.arange(num_nodes, dtype=jnp.int32)
    row = jnp.concatenate([edge_index[0].astype(jnp.int32), loop])
    col = jnp.concatenate([edge_index[1].astype(jnp.int32), loop])
    ew = jnp.concatenate([w, jnp.ones((num_nodes,), jnp.float32)])
    deg = jnp.zeros((num_nodes,), jnp.float32).at[col].add(1.0)
    dinv = jnp.where(deg > 0, deg ** -0.5, 0.0)
    ewn = dinv[row] * ew * dinv[col]
    adj = jnp.zeros((num_nodes, num_nodes), jnp.float32).at[row, col].add(ewn)
    return jnp.eye(num_nodes, dtype=jnp.float32) - adj


if __name__ == "__main__":
    N = 200           # num_nodes  -> Np = 256, two 128-row tiles (parallel axis)
    E = 300           # num edges  -> E_pad = 512, two 256-edge blocks (reduction)
    D = 1             # edge_attr_dim (module default)
    H = 32            # hidden width of edge_weight_net

    key = jax.random.PRNGKey(0)
    k1, k2, k3, k4, k5, k6 = jax.random.split(key, 6)

    # Deterministic synthetic parameters (shapes from nn.Linear(D,32), nn.Linear(32,1))
    w1 = jax.random.normal(k1, (D, H), jnp.float32) * 0.5
    b1 = jax.random.normal(k2, (H,), jnp.float32) * 0.1
    w2 = jax.random.normal(k3, (H, 1), jnp.float32) * 0.5
    b2 = jax.random.normal(k4, (1,), jnp.float32) * 0.1
    params = (w1, b1, w2, b2)

    # Deterministic synthetic graph
    edge_index = jax.random.randint(k5, (2, E), 0, N, dtype=jnp.int32)
    edge_attr = jax.random.normal(k6, (E, D), jnp.float32)

    # row_block=128 / edge_block=128 -> 2x2 grid: exercises the parallel row-tile
    # axis AND the edge-reduction accumulate/finalize path.
    L = graph_laplacian(edge_index, edge_attr, params, N,
                        edge_block=128, row_block=128)
    L = jax.block_until_ready(L)

    L_ref = graph_laplacian_reference(edge_index, edge_attr, params, N)
    assert L.shape == (N, N) and L.dtype == jnp.float32
    # bf16 hi/lo split keeps ~2^-16 relative error on edge weights -> 1e-4 is safe.
    assert jnp.allclose(L, L_ref, atol=1e-4, rtol=1e-4), "mismatch vs reference"

    print("KERNEL_OK")
</pallas_src>

<mosaic_0001>
module attributes {stable_mosaic.version = 11 : i64} {
  func.func @graph_laplacian_kernel(%arg0: i32, %arg1: i32, %arg2: memref<1x256xf32, #tpu.memory_space<vmem>>, %arg3: memref<1x256xi32, #tpu.memory_space<vmem>>, %arg4: memref<1x256xi32, #tpu.memory_space<vmem>>, %arg5: memref<256x1xi32, #tpu.memory_space<vmem>>, %arg6: memref<32x1xf32, #tpu.memory_space<vmem>>, %arg7: memref<32x1xf32, #tpu.memory_space<vmem>>, %arg8: memref<32x1xf32, #tpu.memory_space<vmem>>, %arg9: memref<1x1xf32, #tpu.memory_space<vmem>>, %arg10: memref<128x256xf32, #tpu.memory_space<vmem>>, %arg11: memref<1x256xf32, #tpu.memory_space<vmem>>, %arg12: memref<128x1xf32, #tpu.memory_space<vmem>>) attributes {dimension_semantics = [#tpu.dimension_semantics<parallel>, #tpu.dimension_semantics<arbitrary>], iteration_bounds = array<i64: 2, 2>, scalar_prefetch = 0 : i64, scratch_operands = 2 : i64, tpu.core_type = #tpu.core_type<tc>, window_params = [{transform_indices = @transform_0, window_bounds = array<i64: 1, 256>}, {transform_indices = @transform_1, window_bounds = array<i64: 1, 256>}, {transform_indices = @transform_2, window_bounds = array<i64: 1, 256>}, {transform_indices = @transform_3, window_bounds = array<i64: 256, 1>}, {pipeline_mode = #tpu.pipeline_mode<synchronous>, transform_indices = @transform_4, window_bounds = array<i64: 32, 1>}, {pipeline_mode = #tpu.pipeline_mode<synchronous>, transform_indices = @transform_5, window_bounds = array<i64: 32, 1>}, {pipeline_mode = #tpu.pipeline_mode<synchronous>, transform_indices = @transform_6, window_bounds = array<i64: 32, 1>}, {pipeline_mode = #tpu.pipeline_mode<synchronous>, transform_indices = @transform_7, window_bounds = array<i64: 1, 1>}, {transform_indices = @transform_8, window_bounds = array<i64: 128, 256>}]} {
    %c128_i32 = arith.constant 128 : i32
    %0 = arith.muli %arg0, %c128_i32 : i32
    %c0_i32 = arith.constant 0 : i32
    %1 = arith.cmpi eq, %arg1, %c0_i32 : i32
    %2 = arith.extui %1 : i1 to i32
    %c0_i32_0 = arith.constant 0 : i32
    %3 = arith.cmpi ne, %2, %c0_i32_0 : i32
    scf.if %3 {
      %cst_37 = arith.constant 0.000000e+00 : f32
      %79 = vector.broadcast %cst_37 : f32 to vector<128x256xf32>
      %c0_38 = arith.constant 0 : index
      %c0_39 = arith.constant 0 : index
      %80 = vector.load %arg10[%c0_38, %c0_39] : memref<128x256xf32, #tpu.memory_space<vmem>>, vector<128x256xf32>
      tpu.vector_store %arg10[%c0_38, %c0_39], %79 {strides = array<i32>} : memref<128x256xf32, #tpu.memory_space<vmem>>, vector<128x256xf32>,
      %cst_40 = arith.constant 0.000000e+00 : f32
      %81 = vector.broadcast %cst_40 : f32 to vector<1x256xf32>
      %c0_41 = arith.constant 0 : index
      %c0_42 = arith.constant 0 : index
      %82 = vector.load %arg11[%c0_41, %c0_42] : memref<1x256xf32, #tpu.memory_space<vmem>>, vector<1x256xf32>
      tpu.vector_store %arg11[%c0_41, %c0_42], %81 {strides = array<i32>} : memref<1x256xf32, #tpu.memory_space<vmem>>, vector<1x256xf32>,
      %cst_43 = arith.constant 0.000000e+00 : f32
      %83 = vector.broadcast %cst_43 : f32 to vector<128x1xf32>
      %c0_44 = arith.constant 0 : index
      %c0_45 = arith.constant 0 : index
      %84 = vector.load %arg12[%c0_44, %c0_45] : memref<128x1xf32, #tpu.memory_space<vmem>>, vector<128x1xf32>
      tpu.vector_store %arg12[%c0_44, %c0_45], %83 {strides = array<i32>} : memref<128x1xf32, #tpu.memory_space<vmem>>, vector<128x1xf32>,
    } else {
    }
    %c0 = arith.constant 0 : index
    %c0_1 = arith.constant 0 : index
    %4 = vector.load %arg2[%c0, %c0_1] : memref<1x256xf32, #tpu.memory_space<vmem>>, vector<1x256xf32>
    %c0_2 = arith.constant 0 : index
    %c0_3 = arith.constant 0 : index
    %5 = vector.load %arg6[%c0_2, %c0_3] : memref<32x1xf32, #tpu.memory_space<vmem>>, vector<32x1xf32>
    %6 = vector.broadcast %5 : vector<32x1xf32> to vector<32x256xf32>
    %7 = vector.broadcast %4 : vector<1x256xf32> to vector<32x256xf32>
    %8 = arith.mulf %6, %7 : vector<32x256xf32>
    %c0_4 = arith.constant 0 : index
    %c0_5 = arith.constant 0 : index
    %9 = vector.load %arg7[%c0_4, %c0_5] : memref<32x1xf32, #tpu.memory_space<vmem>>, vector<32x1xf32>
    %10 = vector.broadcast %9 : vector<32x1xf32> to vector<32x256xf32>
    %11 = arith.addf %8, %10 : vector<32x256xf32>
    %cst = arith.constant 0.000000e+00 : f32
    %12 = vector.broadcast %cst : f32 to vector<32x256xf32>
    %13 = arith.maximumf %11, %12 : vector<32x256xf32>
    %c0_6 = arith.constant 0 : index
    %c0_7 = arith.constant 0 : index
    %14 = vector.load %arg8[%c0_6, %c0_7] : memref<32x1xf32, #tpu.memory_space<vmem>>, vector<32x1xf32>
    %15 = vector.broadcast %14 : vector<32x1xf32> to vector<32x256xf32>
    %16 = arith.mulf %13, %15 : vector<32x256xf32>
    %cst_8 = arith.constant dense<0.000000e+00> : vector<256xf32>
    %17 = vector.multi_reduction <add>, %16, %cst_8 [0] : vector<32x256xf32> to vector<256xf32>
    %18 = vector.shape_cast %17 : vector<256xf32> to vector<1x256xf32>
    %c0_9 = arith.constant 0 : index
    %c0_10 = arith.constant 0 : index
    %19 = vector.load %arg9[%c0_9, %c0_10] : memref<1x1xf32, #tpu.memory_space<vmem>>, vector<1x1xf32>
    %20 = vector.broadcast %19 : vector<1x1xf32> to vector<1x256xf32>
    %21 = arith.addf %18, %20 : vector<1x256xf32>
    %22 = arith.negf %21 : vector<1x256xf32>
    %23 = math.exp %22 : vector<1x256xf32>
    %cst_11 = arith.constant 1.000000e+00 : f32
    %24 = vector.broadcast %cst_11 : f32 to vector<1x256xf32>
    %25 = arith.addf %24, %23 : vector<1x256xf32>
    %26 = arith.divf %24, %25 : vector<1x256xf32>
    %27 = arith.truncf %26 : vector<1x256xf32> to vector<1x256xbf16>
    %28 = arith.extf %27 : vector<1x256xbf16> to vector<1x256xf32>
    %29 = arith.subf %26, %28 : vector<1x256xf32>
    %30 = tpu.iota {dimensions = array<i32: 0>} : vector<128x256xi32>
    %31 = vector.broadcast %0 : i32 to vector<128x256xi32>
    %32 = arith.addi %31, %30 : vector<128x256xi32>
    %c0_12 = arith.constant 0 : index
    %c0_13 = arith.constant 0 : index
    %33 = vector.load %arg3[%c0_12, %c0_13] : memref<1x256xi32, #tpu.memory_space<vmem>>, vector<1x256xi32>
    %34 = vector.broadcast %33 : vector<1x256xi32> to vector<128x256xi32>
    %35 = arith.cmpi eq, %34, %32 : vector<128x256xi32>
    %cst_14 = arith.constant 0.000000e+00 : f32
    %36 = vector.shape_cast %28 : vector<1x256xf32> to vector<1x256xf32>
    %37 = vector.broadcast %36 : vector<1x256xf32> to vector<128x256xf32>
    %38 = vector.broadcast %cst_14 : f32 to vector<128x256xf32>
    %39 = arith.select %35, %37, %38 : vector<128x256xi1>, vector<128x256xf32>
    %40 = arith.truncf %39 : vector<128x256xf32> to vector<128x256xbf16>
    %cst_15 = arith.constant 0.000000e+00 : f32
    %41 = vector.shape_cast %29 : vector<1x256xf32> to vector<1x256xf32>
    %42 = vector.broadcast %41 : vector<1x256xf32> to vector<128x256xf32>
    %43 = vector.broadcast %cst_15 : f32 to vector<128x256xf32>
    %44 = arith.select %35, %42, %43 : vector<128x256xi1>, vector<128x256xf32>
    %45 = arith.truncf %44 : vector<128x256xf32> to vector<128x256xbf16>
    %46 = tpu.iota {dimensions = array<i32: 1>} : vector<256x256xi32>
    %c0_16 = arith.constant 0 : index
    %c0_17 = arith.constant 0 : index
    %47 = vector.load %arg5[%c0_16, %c0_17] : memref<256x1xi32, #tpu.memory_space<vmem>>, vector<256x1xi32>
    %48 = vector.broadcast %47 : vector<256x1xi32> to vector<256x256xi32>
    %49 = arith.cmpi eq, %48, %46 : vector<256x256xi32>
    %50 = arith.extui %49 : vector<256x256xi1> to vector<256x256xi32>
    %51 = arith.sitofp %50 : vector<256x256xi32> to vector<256x256xf32>
    %52 = arith.truncf %51 : vector<256x256xf32> to vector<256x256xbf16>
    %cst_18 = arith.constant dense<0.000000e+00> : vector<128x256xf32>
    %53 = tpu.matmul %40, %52, %cst_18 {dimension_numbers = #tpu.dot_dimension_numbers<[1], [0], [0], [1], [0, 0, 1, 1], [], []>} : vector<128x256xbf16>, vector<256x256xbf16>, vector<128x256xf32> -> vector<128x256xf32>
    %cst_19 = arith.constant dense<0.000000e+00> : vector<128x256xf32>
    %54 = tpu.matmul %45, %52, %cst_19 {dimension_numbers = #tpu.dot_dimension_numbers<[1], [0], [0], [1], [0, 0, 1, 1], [], []>} : vector<128x256xbf16>, vector<256x256xbf16>, vector<128x256xf32> -> vector<128x256xf32>
    %55 = arith.addf %53, %54 : vector<128x256xf32>
    %c0_20 = arith.constant 0 : index
    %c0_21 = arith.constant 0 : index
    %56 = vector.load %arg10[%c0_20, %c0_21] : memref<128x256xf32, #tpu.memory_space<vmem>>, vector<128x256xf32>
    %57 = arith.addf %56, %55 : vector<128x256xf32>
    %c0_22 = arith.constant 0 : index
    %c0_23 = arith.constant 0 : index
    %58 = vector.load %arg10[%c0_22, %c0_23] : memref<128x256xf32, #tpu.memory_space<vmem>>, vector<128x256xf32>
    tpu.vector_store %arg10[%c0_22, %c0_23], %57 {strides = array<i32>} : memref<128x256xf32, #tpu.memory_space<vmem>>, vector<128x256xf32>,
    %c0_24 = arith.constant 0 : index
    %c0_25 = arith.constant 0 : index
    %59 = vector.load %arg11[%c0_24, %c0_25] : memref<1x256xf32, #tpu.memory_space<vmem>>, vector<1x256xf32>
    %60 = arith.extui %49 : vector<256x256xi1> to vector<256x256xi32>
    %61 = arith.sitofp %60 : vector<256x256xi32> to vector<256x256xf32>
    %cst_26 = arith.constant dense<0.000000e+00> : vector<256xf32>
    %62 = vector.multi_reduction <add>, %61, %cst_26 [0] : vector<256x256xf32> to vector<256xf32>
    %63 = vector.shape_cast %62 : vector<256xf32> to vector<1x256xf32>
    %64 = arith.addf %59, %63 : vector<1x256xf32>
    %c0_27 = arith.constant 0 : index
    %c0_28 = arith.constant 0 : index
    %65 = vector.load %arg11[%c0_27, %c0_28] : memref<1x256xf32, #tpu.memory_space<vmem>>, vector<1x256xf32>
    tpu.vector_store %arg11[%c0_27, %c0_28], %64 {strides = array<i32>} : memref<1x256xf32, #tpu.memory_space<vmem>>, vector<1x256xf32>,
    %c0_29 = arith.constant 0 : index
    %c0_30 = arith.constant 0 : index
    %66 = vector.load %arg4[%c0_29, %c0_30] : memref<1x256xi32, #tpu.memory_space<vmem>>, vector<1x256xi32>
    %67 = vector.broadcast %66 : vector<1x256xi32> to vector<128x256xi32>
    %68 = arith.cmpi eq, %67, %32 : vector<128x256xi32>
    %c0_31 = arith.constant 0 : index
    %c0_32 = arith.constant 0 : index
    %69 = vector.load %arg12[%c0_31, %c0_32] : memref<128x1xf32, #tpu.memory_space<vmem>>, vector<128x1xf32>
    %70 = arith.extui %68 : vector<128x256xi1> to vector<128x256xi32>
    %71 = arith.sitofp %70 : vector<128x256xi32> to vector<128x256xf32>
    %cst_33 = arith.constant dense<0.000000e+00> : vector<128xf32>
    %72 = vector.multi_reduction <add>, %71, %cst_33 [1] : vector<128x256xf32> to vector<128xf32>
    %73 = vector.shape_cast %72 : vector<128xf32> to vector<128x1xf32>
    %74 = arith.addf %69, %73 : vector<128x1xf32>
    %c0_34 = arith.constant 0 : index
    %c0_35 = arith.constant 0 : index
    %75 = vector.load %arg12[%c0_34, %c0_35] : memref<128x1xf32, #tpu.memory_space<vmem>>, vector<128x1xf32>
    tpu.vector_store %arg12[%c0_34, %c0_35], %74 {strides = array<i32>} : memref<128x1xf32, #tpu.memory_space<vmem>>, vector<128x1xf32>,
    %c1_i32 = arith.constant 1 : i32
    %76 = arith.cmpi eq, %arg1, %c1_i32 : i32
    %77 = arith.extui %76 : i1 to i32
    %c0_i32_36 = arith.constant 0 : i32
    %78 = arith.cmpi ne, %77, %c0_i32_36 : i32
    scf.if %78 {
      %c0_37 = arith.constant 0 : index
      %c0_38 = arith.constant 0 : index
      %79 = vector.load %arg11[%c0_37, %c0_38] : memref<1x256xf32, #tpu.memory_space<vmem>>, vector<1x256xf32>
      %cst_39 = arith.constant 1.000000e+00 : f32
      %80 = vector.broadcast %cst_39 : f32 to vector<1x256xf32>
      %81 = arith.addf %79, %80 : vector<1x256xf32>
      %82 = math.rsqrt %81 : vector<1x256xf32>
      %c0_40 = arith.constant 0 : index
      %c0_41 = arith.constant 0 : index
      %83 = vector.load %arg12[%c0_40, %c0_41] : memref<128x1xf32, #tpu.memory_space<vmem>>, vector<128x1xf32>
      %cst_42 = arith.constant 1.000000e+00 : f32
      %84 = vector.broadcast %cst_42 : f32 to vector<128x1xf32>
      %85 = arith.addf %83, %84 : vector<128x1xf32>
      %86 = math.rsqrt %85 : vector<128x1xf32>
      %c0_43 = arith.constant 0 : index
      %c0_44 = arith.constant 0 : index
      %87 = vector.load %arg10[%c0_43, %c0_44] : memref<128x256xf32, #tpu.memory_space<vmem>>, vector<128x256xf32>
      %88 = vector.broadcast %82 : vector<1x256xf32> to vector<128x256xf32>
      %89 = arith.mulf %87, %88 : vector<128x256xf32>
      %90 = vector.broadcast %86 : vector<128x1xf32> to vector<128x256xf32>
      %91 = arith.mulf %89, %90 : vector<128x256xf32>
      %92 = tpu.iota {dimensions = array<i32: 0>} : vector<128x256xi32>
      %93 = vector.broadcast %0 : i32 to vector<128x256xi32>
      %94 = arith.addi %93, %92 : vector<128x256xi32>
      %95 = tpu.iota {dimensions = array<i32: 1>} : vector<128x256xi32>
      %96 = arith.mulf %86, %86 : vector<128x1xf32>
      %cst_45 = arith.constant 1.000000e+00 : f32
      %97 = vector.broadcast %cst_45 : f32 to vector<128x1xf32>
      %98 = arith.subf %97, %96 : vector<128x1xf32>
      %99 = arith.cmpi eq, %94, %95 : vector<128x256xi32>
      %cst_46 = arith.constant 0.000000e+00 : f32
      %100 = vector.shape_cast %98 : vector<128x1xf32> to vector<128x1xf32>
      %101 = vector.broadcast %100 : vector<128x1xf32> to vector<128x256xf32>
      %102 = vector.broadcast %cst_46 : f32 to vector<128x256xf32>
      %103 = arith.select %99, %101, %102 : vector<128x256xi1>, vector<128x256xf32>
      %104 = arith.subf %103, %91 : vector<128x256xf32>
      %c0_47 = arith.constant 0 : index
      %c0_48 = arith.constant 0 : index
      %105 = vector.load %arg10[%c0_47, %c0_48] : memref<128x256xf32, #tpu.memory_space<vmem>>, vector<128x256xf32>
      tpu.vector_store %arg10[%c0_47, %c0_48], %104 {strides = array<i32>} : memref<128x256xf32, #tpu.memory_space<vmem>>, vector<128x256xf32>,
    } else {
    }
    return
  }
  func.func @transform_0(%arg0: i32, %arg1: i32) -> (i32, i32) {
    %c0_i32 = arith.constant 0 : i32
    %c0_i32_0 = arith.constant 0 : i32
    return %c0_i32, %arg1 : i32, i32
  }
  func.func @transform_1(%arg0: i32, %arg1: i32) -> (i32, i32) {
    %c0_i32 = arith.constant 0 : i32
    %c0_i32_0 = arith.constant 0 : i32
    return %c0_i32, %arg1 : i32, i32
  }
  func.func @transform_2(%arg0: i32, %arg1: i32) -> (i32, i32) {
    %c0_i32 = arith.constant 0 : i32
    %c0_i32_0 = arith.constant 0 : i32
    return %c0_i32, %arg1 : i32, i32
  }
  func.func @transform_3(%arg0: i32, %arg1: i32) -> (i32, i32) {
    %c0_i32 = arith.constant 0 : i32
    %c0_i32_0 = arith.constant 0 : i32
    return %arg1, %c0_i32 : i32, i32
  }
  func.func @transform_4(%arg0: i32, %arg1: i32) -> (i32, i32) {
    %c0_i32 = arith.constant 0 : i32
    %c0_i32_0 = arith.constant 0 : i32
    %c0_i32_1 = arith.constant 0 : i32
    return %c0_i32, %c0_i32_0 : i32, i32
  }
  func.func @transform_5(%arg0: i32, %arg1: i32) -> (i32, i32) {
    %c0_i32 = arith.constant 0 : i32
    %c0_i32_0 = arith.constant 0 : i32
    %c0_i32_1 = arith.constant 0 : i32
    return %c0_i32, %c0_i32_0 : i32, i32
  }
  func.func @transform_6(%arg0: i32, %arg1: i32) -> (i32, i32) {
    %c0_i32 = arith.constant 0 : i32
    %c0_i32_0 = arith.constant 0 : i32
    %c0_i32_1 = arith.constant 0 : i32
    return %c0_i32, %c0_i32_0 : i32, i32
  }
  func.func @transform_7(%arg0: i32, %arg1: i32) -> (i32, i32) {
    %c0_i32 = arith.constant 0 : i32
    %c0_i32_0 = arith.constant 0 : i32
    %c0_i32_1 = arith.constant 0 : i32
    return %c0_i32, %c0_i32_0 : i32, i32
  }
  func.func @transform_8(%arg0: i32, %arg1: i32) -> (i32, i32) {
    %c0_i32 = arith.constant 0 : i32
    %c0_i32_0 = arith.constant 0 : i32
    return %arg0, %c0_i32 : i32, i32
  }
}

</mosaic_0001>

<llo_original>
// kernel: tpu_custom_call.1
$region0: #{tpu_custom_call.1}
  #allocation0 [shape = 'u32[]', space=smem, size = 0x4, offset = 0x4, fixed_abs, tag = 'smem constant byte address 0x4 - core index']
  #allocation1 [shape = 'u32[144,128]{1,0:T(1,128)}', space=vmem, size = 0x12000, scoped, tag = 'internal scratch']
  #allocation2 [shape = 'f32[1,256]{1,0:T(1,128)}', space=vmem, size = 0x400, scoped, tag = 'scratch operand']
  #allocation3 [shape = 'f32[128,1]{1,0:T(8,128)}', space=vmem, size = 0x10000, scoped, tag = 'scratch operand']
  #allocation4 [shape = 'f32[1,1]{1,0:T(1,128)S(1)}', space=vmem, size = 0x200, scoped, tag = 'scoped memory for tpu_custom_call.1']
  %s0 = inlined_call_operand.vmem [shape: f32[1,512], index: 0, kind: input, shape index: {}]
  %s1 = inlined_call_operand.vmem [shape: s32[1,512], index: 1, kind: input, shape index: {}]
  %s2 = inlined_call_operand.vmem [shape: s32[1,512], index: 2, kind: input, shape index: {}]
  %s3 = inlined_call_operand.vmem [shape: s32[512,1], index: 3, kind: input, shape index: {}]
  %s4 = inlined_call_operand.vmem [shape: f32[32,1], index: 4, kind: input, shape index: {}]
  %s5 = inlined_call_operand.vmem [shape: f32[32,1], index: 5, kind: input, shape index: {}]
  %s6 = inlined_call_operand.vmem [shape: f32[32,1], index: 6, kind: input, shape index: {}]
  %s7 = inlined_call_operand.<no memory space> [shape: f32[1,1], index: 7, kind: input, shape index: {}]
  %s8 = inlined_call_operand.hbm [shape: f32[256,256], index: 8, kind: output, shape index: {}]
  %s9 = sld [smem:[#allocation0]]
  $region73: #{tpu_custom_call.1} parent=0
    _
  %s11 = ssub.s32 1, %s9
  %s12 = scalar_select 0, %s11, %s9
  %v13 = vstv %s7
  %14 = vst [vmem:[#allocation4] sm:$0x1] %v13
  $region1: #{tpu_custom_call.1} parent=0
    #allocation5 [shape = 'u8[262144]{0}', space=vmem, size = 0x40000, scoped, tag = 'output window, operand 0']
    #allocation6 [shape = 's32[2]{0}', space=sflag, size = 0x8, scoped, tag = 'scoped memory for tpu_custom_call.1']
    %15 = vsyncpa [#allocation6], 0
    %s16 = scalar_lea.sflag [#allocation6], 1
    %17 = vsyncpa %s16, 0
    loop: start=0, step=1, limit=6
    $region2: #{tpu_custom_call.1} parent=1 // loop_pre_header
      _
    $region3: #{tpu_custom_call.1} parent=1 // loop_header
      %s19 = sphi 0, %s23
      %p20 = scmp.ge.s32.totalorder %s19, 6
      %s26 = sphi 0, %s38
      %s27 = sphi 0, %s34
      %s28 = sphi 0, %s26
      %s29 = sphi 0, %s27
      %s30 = sphi 0, %s28
      %s31 = sphi 0, %s29
      %s41 = sphi 0, %s43
      %s44 = sphi 0, %s41
      %s45 = sphi 0, %s44
      %s61 = sphi 0, %s45
      %s67 = sphi 0, %s69
      %s70 = sphi 0, %s67
      %s71 = sphi 0, %s70
      %s87 = sphi 0, %s71
      %s93 = sphi 0, %s95
      %s96 = sphi 0, %s93
      %s97 = sphi 0, %s96
      %s113 = sphi 0, %s97
      %s119 = sphi 0, %s121
      %s122 = sphi 0, %s119
      %s123 = sphi 0, %s122
      %s139 = sphi 0, %s123
      %s143 = sphi 0, %s143
      %s145 = sphi 0, %s143
      %s146 = sphi 0, %s145
      %s160 = sphi 0, %s146
      %s164 = sphi 0, %s164
      %s166 = sphi 0, %s164
      %s167 = sphi 0, %s166
      %s181 = sphi 0, %s167
      %s185 = sphi 0, %s185
      %s187 = sphi 0, %s185
      %s188 = sphi 0, %s187
      %s202 = sphi 0, %s188
      %s206 = sphi 0, %s206
      %s208 = sphi 0, %s206
      %s209 = sphi 0, %s208
      %s223 = sphi 0, %s209
      %s229 = sphi 0, %s231
      %s232 = sphi 0, %s229
      %s233 = sphi 0, %s232
      %s249 = sphi 0, %s233
    $region4: #{tpu_custom_call.1} parent=1 // loop_header_branch
      %22 = sbr.rel (%p20) target = $region8
    $region5: #{tpu_custom_call.1} parent=1 // loop_body
      %s24 = ssub.s32 %s19, 1
      %s25 = ssub.s32 %s19, 2
      %s32 = sadd.s32 1, %s27
      %p33 = scmp.ge.s32.totalorder %s32, 2
      %s34 = scalar_select %p33, 0, %s32
      %s35 = sadd.s32 1, %s26
      %s36 = scalar_select %p33, %s35, %s26
      %p37 = scmp.ge.s32.totalorder %s36, 2
      %s38 = scalar_select %p37, 0, %s36
      %s39 = ssub.s32 %s27, %s34
      %p40 = scmp.eq.s32.totalorder %s39, 0
      %s42 = sadd.s32 %s41, 1
      %s43 = scalar_select %p40, %s41, %s42
      %p46 = pneg %p40
      %p47 = scmp.eq.s32.totalorder %s19, 3
      %p48 = por %p46, %p47
      %p49 = scmp.ne.s32.totalorder %s41, %s44
      %p50 = scmp.eq.s32.totalorder %s19, 0
      %p51 = por %p49, %p50
      %p52 = scmp.ne.s32.totalorder %s41, %s44
      %p53 = scmp.eq.s32.totalorder %s24, 3
      %p54 = por %p52, %p53
      %p55 = scmp.ne.s32.totalorder %s44, %s45
      %p56 = scmp.eq.s32.totalorder %s24, 0
      %p57 = por %p55, %p56
      %p58 = scmp.ne.s32.totalorder %s44, %s45
      %p59 = scmp.eq.s32.totalorder %s25, 3
      %p60 = por %p58, %p59
      %p62 = scmp.ne.s32.totalorder %s45, %s61
      %p63 = scmp.eq.s32.totalorder %s25, 0
      %p64 = por %p62, %p63
      %s65 = ssub.s32 %s27, %s34
      %p66 = scmp.eq.s32.totalorder %s65, 0
      %s68 = sadd.s32 %s67, 1
      %s69 = scalar_select %p66, %s67, %s68
      %p72 = pneg %p66
      %p73 = scmp.eq.s32.totalorder %s19, 3
      %p74 = por %p72, %p73
      %p75 = scmp.ne.s32.totalorder %s67, %s70
      %p76 = scmp.eq.s32.totalorder %s19, 0
      %p77 = por %p75, %p76
      %p78 = scmp.ne.s32.totalorder %s67, %s70
      %p79 = scmp.eq.s32.totalorder %s24, 3
      %p80 = por %p78, %p79
      %p81 = scmp.ne.s32.totalorder %s70, %s71
      %p82 = scmp.eq.s32.totalorder %s24, 0
      %p83 = por %p81, %p82
      %p84 = scmp.ne.s32.totalorder %s70, %s71
      %p85 = scmp.eq.s32.totalorder %s25, 3
      %p86 = por %p84, %p85
      %p88 = scmp.ne.s32.totalorder %s71, %s87
      %p89 = scmp.eq.s32.totalorder %s25, 0
      %p90 = por %p88, %p89
      %s91 = ssub.s32 %s27, %s34
      %p92 = scmp.eq.s32.totalorder %s91, 0
      %s94 = sadd.s32 %s93, 1
      %s95 = scalar_select %p92, %s93, %s94
      %p98 = pneg %p92
      %p99 = scmp.eq.s32.totalorder %s19, 3
      %p100 = por %p98, %p99
      %p101 = scmp.ne.s32.totalorder %s93, %s96
      %p102 = scmp.eq.s32.totalorder %s19, 0
      %p103 = por %p101, %p102
      %p104 = scmp.ne.s32.totalorder %s93, %s96
      %p105 = scmp.eq.s32.totalorder %s24, 3
      %p106 = por %p104, %p105
      %p107 = scmp.ne.s32.totalorder %s96, %s97
      %p108 = scmp.eq.s32.totalorder %s24, 0
      %p109 = por %p107, %p108
      %p110 = scmp.ne.s32.totalorder %s96, %s97
      %p111 = scmp.eq.s32.totalorder %s25, 3
      %p112 = por %p110, %p111
      %p114 = scmp.ne.s32.totalorder %s97, %s113
      %p115 = scmp.eq.s32.totalorder %s25, 0
      %p116 = por %p114, %p115
      %s117 = ssub.s32 %s27, %s34
      %p118 = scmp.eq.s32.totalorder %s117, 0
      %s120 = sadd.s32 %s119, 1
      %s121 = scalar_select %p118, %s119, %s120
      %p124 = pneg %p118
      %p125 = scmp.eq.s32.totalorder %s19, 3
      %p126 = por %p124, %p125
      %p127 = scmp.ne.s32.totalorder %s119, %s122
      %p128 = scmp.eq.s32.totalorder %s19, 0
      %p129 = por %p127, %p128
      %p130 = scmp.ne.s32.totalorder %s119, %s122
      %p131 = scmp.eq.s32.totalorder %s24, 3
      %p132 = por %p130, %p131
      %p133 = scmp.ne.s32.totalorder %s122, %s123
      %p134 = scmp.eq.s32.totalorder %s24, 0
      %p135 = por %p133, %p134
      %p136 = scmp.ne.s32.totalorder %s122, %s123
      %p137 = scmp.eq.s32.totalorder %s25, 3
      %p138 = por %p136, %p137
      %p140 = scmp.ne.s32.totalorder %s123, %s139
      %p141 = scmp.eq.s32.totalorder %s25, 0
      %p142 = por %p140, %p141
      %s144 = sadd.s32 %s143, 1
      %p147 = scmp.eq.s32.totalorder %s19, 3
      %p148 = scmp.ne.s32.totalorder %s143, %s145
      %p149 = scmp.eq.s32.totalorder %s19, 0
      %p150 = por %p148, %p149
      %p151 = scmp.ne.s32.totalorder %s143, %s145
      %p152 = scmp.eq.s32.totalorder %s24, 3
      %p153 = por %p151, %p152
      %p154 = scmp.ne.s32.totalorder %s145, %s146
      %p155 = scmp.eq.s32.totalorder %s24, 0
      %p156 = por %p154, %p155
      %p157 = scmp.ne.s32.totalorder %s145, %s146
      %p158 = scmp.eq.s32.totalorder %s25, 3
      %p159 = por %p157, %p158
      %p161 = scmp.ne.s32.totalorder %s146, %s160
      %p162 = scmp.eq.s32.totalorder %s25, 0
      %p163 = por %p161, %p162
      %s165 = sadd.s32 %s164, 1
      %p168 = scmp.eq.s32.totalorder %s19, 3
      %p169 = scmp.ne.s32.totalorder %s164, %s166
      %p170 = scmp.eq.s32.totalorder %s19, 0
      %p171 = por %p169, %p170
      %p172 = scmp.ne.s32.totalorder %s164, %s166
      %p173 = scmp.eq.s32.totalorder %s24, 3
      %p174 = por %p172, %p173
      %p175 = scmp.ne.s32.totalorder %s166, %s167
      %p176 = scmp.eq.s32.totalorder %s24, 0
      %p177 = por %p175, %p176
      %p178 = scmp.ne.s32.totalorder %s166, %s167
      %p179 = scmp.eq.s32.totalorder %s25, 3
      %p180 = por %p178, %p179
      %p182 = scmp.ne.s32.totalorder %s167, %s181
      %p183 = scmp.eq.s32.totalorder %s25, 0
      %p184 = por %p182, %p183
      %s186 = sadd.s32 %s185, 1
      %p189 = scmp.eq.s32.totalorder %s19, 3
      %p190 = scmp.ne.s32.totalorder %s185, %s187
      %p191 = scmp.eq.s32.totalorder %s19, 0
      %p192 = por %p190, %p191
      %p193 = scmp.ne.s32.totalorder %s185, %s187
      %p194 = scmp.eq.s32.totalorder %s24, 3
      %p195 = por %p193, %p194
      %p196 = scmp.ne.s32.totalorder %s187, %s188
      %p197 = scmp.eq.s32.totalorder %s24, 0
      %p198 = por %p196, %p197
      %p199 = scmp.ne.s32.totalorder %s187, %s188
      %p200 = scmp.eq.s32.totalorder %s25, 3
      %p201 = por %p199, %p200
      %p203 = scmp.ne.s32.totalorder %s188, %s202
      %p204 = scmp.eq.s32.totalorder %s25, 0
      %p205 = por %p203, %p204
      %s207 = sadd.s32 %s206, 1
      %p210 = scmp.eq.s32.totalorder %s19, 3
      %p211 = scmp.ne.s32.totalorder %s206, %s208
      %p212 = scmp.eq.s32.totalorder %s19, 0
      %p213 = por %p211, %p212
      %p214 = scmp.ne.s32.totalorder %s206, %s208
      %p215 = scmp.eq.s32.totalorder %s24, 3
      %p216 = por %p214, %p215
      %p217 = scmp.ne.s32.totalorder %s208, %s209
      %p218 = scmp.eq.s32.totalorder %s24, 0
      %p219 = por %p217, %p218
      %p220 = scmp.ne.s32.totalorder %s208, %s209
      %p221 = scmp.eq.s32.totalorder %s25, 3
      %p222 = por %p220, %p221
      %p224 = scmp.ne.s32.totalorder %s209, %s223
      %p225 = scmp.eq.s32.totalorder %s25, 0
      %p226 = por %p224, %p225
      %s227 = ssub.s32 %s26, %s38
      %p228 = scmp.eq.s32.totalorder %s227, 0
      %s230 = sadd.s32 %s229, 1
      %s231 = scalar_select %p228, %s229, %s230
      %p234 = pneg %p228
      %p235 = scmp.eq.s32.totalorder %s19, 3
      %p236 = por %p234, %p235
      %p237 = scmp.ne.s32.totalorder %s229, %s232
      %p238 = scmp.eq.s32.totalorder %s19, 0
      %p239 = por %p237, %p238
      %p240 = scmp.ne.s32.totalorder %s229, %s232
      %p241 = scmp.eq.s32.totalorder %s24, 3
      %p242 = por %p240, %p241
      %p243 = scmp.ne.s32.totalorder %s232, %s233
      %p244 = scmp.eq.s32.totalorder %s24, 0
      %p245 = por %p243, %p244
      %p246 = scmp.ne.s32.totalorder %s232, %s233
      %p247 = scmp.eq.s32.totalorder %s25, 3
      %p248 = por %p246, %p247
      %p250 = scmp.ne.s32.totalorder %s233, %s249
      %p251 = scmp.eq.s32.totalorder %s25, 0
      %p252 = por %p250, %p251
      %p253 = scmp.le.s32.totalorder 1, %s19
      %p254 = scmp.lt.s32.totalorder %s19, 5
      %p255 = pnand %p253, %p254
      %p256 = pneg %p255
      // Predicated region
      $region9: #{tpu_custom_call.1} parent=5 // pred_check
        _
      $region10: #{tpu_custom_call.1} parent=5 // pred_check_branch
        %258 = sbr.rel (%p255) target = $region12
      $region11: #{tpu_custom_call.1} parent=5 // pred_region
        %s259 = ssub.s32 %s19, 1
        // Predicated region
        $region13: #{tpu_custom_call.1} parent=11 // pred_check
          %p260 = pneg %p156
        $region14: #{tpu_custom_call.1} parent=11 // pred_check_branch
          %262 = sbr.rel (%p260) target = $region16
        $region15: #{tpu_custom_call.1} parent=11 // pred_region
          _
        $region16: #{tpu_custom_call.1} parent=11 // pred_fallthru
          _
        // Predicated region
        $region17: #{tpu_custom_call.1} parent=11 // pred_check
          %p263 = pneg %p177
        $region18: #{tpu_custom_call.1} parent=11 // pred_check_branch
          %265 = sbr.rel (%p263) target = $region20
        $region19: #{tpu_custom_call.1} parent=11 // pred_region
          _
        $region20: #{tpu_custom_call.1} parent=11 // pred_fallthru
          _
        // Predicated region
        $region21: #{tpu_custom_call.1} parent=11 // pred_check
          %p266 = pneg %p198
        $region22: #{tpu_custom_call.1} parent=11 // pred_check_branch
          %268 = sbr.rel (%p266) target = $region24
        $region23: #{tpu_custom_call.1} parent=11 // pred_region
          _
        $region24: #{tpu_custom_call.1} parent=11 // pred_fallthru
          _
        // Predicated region
        $region25: #{tpu_custom_call.1} parent=11 // pred_check
          %p269 = pneg %p219
        $region26: #{tpu_custom_call.1} parent=11 // pred_check_branch
          %271 = sbr.rel (%p269) target = $region28
        $region27: #{tpu_custom_call.1} parent=11 // pred_region
          _
        $region28: #{tpu_custom_call.1} parent=11 // pred_fallthru
          _
      $region12: #{tpu_custom_call.1} parent=5 // pred_fallthru
        _
      %p272 = scmp.lt.s32.totalorder %s19, 4
      // Predicated region
      $region29: #{tpu_custom_call.1} parent=5 // pred_check
        %p273 = pneg %p272
      $region30: #{tpu_custom_call.1} parent=5 // pred_check_branch
        %275 = sbr.rel (%p273) target = $region32
      $region31: #{tpu_custom_call.1} parent=5 // pred_region
        // Predicated region
        $region33: #{tpu_custom_call.1} parent=31 // pred_check
          %p276 = pneg %p51
        $region34: #{tpu_custom_call.1} parent=31 // pred_check_branch
          %278 = sbr.rel (%p276) target = $region36
        $region35: #{tpu_custom_call.1} parent=31 // pred_region
          %s279 = smul.u32 2, %s27
          %p280 = scmp.lt.s32.totalorder %s279, 3
          %s281 = scalar_select %p280, %s279, 3
          %s282 = scalar_lea.vmem %s0, %s281
          %s283 = smul.u32 2, %s27
        $region36: #{tpu_custom_call.1} parent=31 // pred_fallthru
          _
        // Predicated region
        $region37: #{tpu_custom_call.1} parent=31 // pred_check
          %p284 = pneg %p77
        $region38: #{tpu_custom_call.1} parent=31 // pred_check_branch
          %286 = sbr.rel (%p284) target = $region40
        $region39: #{tpu_custom_call.1} parent=31 // pred_region
          %s287 = smul.u32 2, %s27
          %p288 = scmp.lt.s32.totalorder %s287, 3
          %s289 = scalar_select %p288, %s287, 3
          %s290 = scalar_lea.vmem %s1, %s289
          %s291 = smul.u32 2, %s27
        $region40: #{tpu_custom_call.1} parent=31 // pred_fallthru
          _
        // Predicated region
        $region41: #{tpu_custom_call.1} parent=31 // pred_check
          %p292 = pneg %p103
        $region42: #{tpu_custom_call.1} parent=31 // pred_check_branch
          %294 = sbr.rel (%p292) target = $region44
        $region43: #{tpu_custom_call.1} parent=31 // pred_region
          %s295 = smul.u32 2, %s27
          %p296 = scmp.lt.s32.totalorder %s295, 3
          %s297 = scalar_select %p296, %s295, 3
          %s298 = scalar_lea.vmem %s2, %s297
          %s299 = smul.u32 2, %s27
        $region44: #{tpu_custom_call.1} parent=31 // pred_fallthru
          _
        // Predicated region
        $region45: #{tpu_custom_call.1} parent=31 // pred_check
          %p300 = pneg %p129
        $region46: #{tpu_custom_call.1} parent=31 // pred_check_branch
          %302 = sbr.rel (%p300) target = $region48
        $region47: #{tpu_custom_call.1} parent=31 // pred_region
          %s303 = smul.u32 32, %s27
          %p304 = scmp.lt.s32.totalorder %s303, 63
          %s305 = scalar_select %p304, %s303, 63
          %s306 = smul.addr %s305, 8
          %s307 = scalar_lea.vmem %s3, %s306
          %s308 = smul.u32 32, %s27
        $region48: #{tpu_custom_call.1} parent=31 // pred_fallthru
          _
      $region32: #{tpu_custom_call.1} parent=5 // pred_fallthru
        _
      %p309 = scmp.le.s32.totalorder 1, %s19
      %p310 = scmp.lt.s32.totalorder %s19, 5
      %p311 = pnand %p309, %p310
      %p312 = pneg %p311
      // Predicated region
      $region49: #{tpu_custom_call.1} parent=5 // pred_check
        _
      $region50: #{tpu_custom_call.1} parent=5 // pred_check_branch
        %314 = sbr.rel (%p311) target = $region52
      $region51: #{tpu_custom_call.1} parent=5 // pred_region
        %s315 = ssub.s32 %s19, 1
        %s316 = smul.u32 2, %s29
        %p317 = scmp.lt.s32.totalorder %s316, 3
        %s318 = scalar_select %p317, %s316, 3
        %s319 = scalar_lea.vmem %s0, %s318
        %p320 = pneg %p57
        %p321 = pneg %p54
        %s322 = smul.u32 2, %s29
        %p323 = scmp.lt.s32.totalorder %s322, 3
        %s324 = scalar_select %p323, %s322, 3
        %s325 = scalar_lea.vmem %s1, %s324
        %p326 = pneg %p83
        %p327 = pneg %p80
        %s328 = smul.u32 2, %s29
        %p329 = scmp.lt.s32.totalorder %s328, 3
        %s330 = scalar_select %p329, %s328, 3
        %s331 = scalar_lea.vmem %s2, %s330
        %p332 = pneg %p109
        %p333 = pneg %p106
        %s334 = smul.u32 32, %s29
        %p335 = scmp.lt.s32.totalorder %s334, 63
        %s336 = scalar_select %p335, %s334, 63
        %s337 = smul.addr %s336, 8
        %s338 = scalar_lea.vmem %s3, %s337
        %p339 = pneg %p135
        %p340 = pneg %p132
        %p341 = pneg %p156
        %p342 = pneg %p153
        %p343 = pneg %p177
        %p344 = pneg %p174
        %p345 = pneg %p198
        %p346 = pneg %p195
        %p347 = pneg %p219
        %p348 = pneg %p216
        %p349 = pneg %p245
        %p350 = pneg %p242
        %s351 = sand.u32 %s232, 1
        %s352 = scalar_lea.sflag [#allocation6], %s351
        %s353 = sand.u32 %s232, 1
        %s354 = smul.addr %s353, 256
        %s355 = scalar_lea.vmem [#allocation5], %s354
        %s356 = smul.u32 2, %s29
        %p357 = scmp.lt.s32.totalorder %s356, 3
        %s358 = scalar_select %p357, %s356, 3
        %s359 = scalar_lea.vmem %s0, %s358
        %s360 = smul.u32 2, %s29
        %s361 = smul.u32 2, %s29
        %p362 = scmp.lt.s32.totalorder %s361, 3
        %s363 = scalar_select %p362, %s361, 3
        %s364 = scalar_lea.vmem %s1, %s363
        %s365 = smul.u32 2, %s29
        %s366 = smul.u32 2, %s29
        %p367 = scmp.lt.s32.totalorder %s366, 3
        %s368 = scalar_select %p367, %s366, 3
        %s369 = scalar_lea.vmem %s2, %s368
        %s370 = smul.u32 2, %s29
        %s371 = smul.u32 32, %s29
        %p372 = scmp.lt.s32.totalorder %s371, 63
        %s373 = scalar_select %p372, %s371, 63
        %s374 = smul.addr %s373, 8
        %s375 = scalar_lea.vmem %s3, %s374
        %s376 = smul.u32 32, %s29
        %s377 = smul.u32 16, %s28
        %s378 = smul.u32 %s28, 128
        %p379 = scmp.eq.s32.totalorder %s29, 0
        // Predicated region
        $region53: #{tpu_custom_call.1} parent=51 // pred_check
          %p380 = pneg %p379
        $region54: #{tpu_custom_call.1} parent=51 // pred_check_branch
          %382 = sbr.rel (%p380) target = $region56
        $region55: #{tpu_custom_call.1} parent=51 // pred_region
          %383 = vst [vmem:[%s355] sm:$0xff] 0.0
          %384 = vst [vmem:[%s355 + $0x8] sm:$0xff] 0.0
          %385 = vst [vmem:[%s355 + $0x10] sm:$0xff] 0.0
          %386 = vst [vmem:[%s355 + $0x18] sm:$0xff] 0.0
          %387 = vst [vmem:[%s355 + $0x20] sm:$0xff] 0.0
          %388 = vst [vmem:[%s355 + $0x28] sm:$0xff] 0.0
          %389 = vst [vmem:[%s355 + $0x30] sm:$0xff] 0.0
          %390 = vst [vmem:[%s355 + $0x38] sm:$0xff] 0.0
          %391 = vst [vmem:[%s355 + $0x40] sm:$0xff] 0.0
          %392 = vst [vmem:[%s355 + $0x48] sm:$0xff] 0.0
          %393 = vst [vmem:[%s355 + $0x50] sm:$0xff] 0.0
          %394 = vst [vmem:[%s355 + $0x58] sm:$0xff] 0.0
          %395 = vst [vmem:[%s355 + $0x60] sm:$0xff] 0.0
          %396 = vst [vmem:[%s355 + $0x68] sm:$0xff] 0.0
          %397 = vst [vmem:[%s355 + $0x70] sm:$0xff] 0.0
          %398 = vst [vmem:[%s355 + $0x78] sm:$0xff] 0.0
          %399 = vst [vmem:[%s355 + $0x80] sm:$0xff] 0.0
          %400 = vst [vmem:[%s355 + $0x88] sm:$0xff] 0.0
          %401 = vst [vmem:[%s355 + $0x90] sm:$0xff] 0.0
          %402 = vst [vmem:[%s355 + $0x98] sm:$0xff] 0.0
          %403 = vst [vmem:[%s355 + $0xa0] sm:$0xff] 0.0
          %404 = vst [vmem:[%s355 + $0xa8] sm:$0xff] 0.0
          %405 = vst [vmem:[%s355 + $0xb0] sm:$0xff] 0.0
          %406 = vst [vmem:[%s355 + $0xb8] sm:$0xff] 0.0
          %407 = vst [vmem:[%s355 + $0xc0] sm:$0xff] 0.0
          %408 = vst [vmem:[%s355 + $0xc8] sm:$0xff] 0.0
          %409 = vst [vmem:[%s355 + $0xd0] sm:$0xff] 0.0
          %410 = vst [vmem:[%s355 + $0xd8] sm:$0xff] 0.0
          %411 = vst [vmem:[%s355 + $0xe0] sm:$0xff] 0.0
          %412 = vst [vmem:[%s355 + $0xe8] sm:$0xff] 0.0
          %413 = vst [vmem:[%s355 + $0xf0] sm:$0xff] 0.0
          %414 = vst [vmem:[%s355 + $0xf8] sm:$0xff] 0.0
          %v415 = vlaneseq
          %vm416 = vcmp.ge.s32.totalorder %v415, 0
          %vm417 = vcmp.lt.s32.totalorder %v415, 256
          %vm418 = vmand %vm416, %vm417
          %419 = vst.msk [vmem:[#allocation2] sm:$0x3] %vm418, 0.0
          %vm420 = vcmask 7168
          %421 = vst.msk [vmem:[#allocation3] sm:$0xff] %vm420, 0.0
          %422 = vst.msk [vmem:[#allocation3 + $0x8] sm:$0xff] %vm420, 0.0
          %423 = vst.msk [vmem:[#allocation3 + $0x10] sm:$0xff] %vm420, 0.0
          %424 = vst.msk [vmem:[#allocation3 + $0x18] sm:$0xff] %vm420, 0.0
          %425 = vst.msk [vmem:[#allocation3 + $0x20] sm:$0xff] %vm420, 0.0
          %426 = vst.msk [vmem:[#allocation3 + $0x28] sm:$0xff] %vm420, 0.0
          %427 = vst.msk [vmem:[#allocation3 + $0x30] sm:$0xff] %vm420, 0.0
          %428 = vst.msk [vmem:[#allocation3 + $0x38] sm:$0xff] %vm420, 0.0
          %429 = vst.msk [vmem:[#allocation3 + $0x40] sm:$0xff] %vm420, 0.0
          %430 = vst.msk [vmem:[#allocation3 + $0x48] sm:$0xff] %vm420, 0.0
          %431 = vst.msk [vmem:[#allocation3 + $0x50] sm:$0xff] %vm420, 0.0
          %432 = vst.msk [vmem:[#allocation3 + $0x58] sm:$0xff] %vm420, 0.0
          %433 = vst.msk [vmem:[#allocation3 + $0x60] sm:$0xff] %vm420, 0.0
          %434 = vst.msk [vmem:[#allocation3 + $0x68] sm:$0xff] %vm420, 0.0
          %435 = vst.msk [vmem:[#allocation3 + $0x70] sm:$0xff] %vm420, 0.0
          %436 = vst.msk [vmem:[#allocation3 + $0x78] sm:$0xff] %vm420, 0.0
        $region56: #{tpu_custom_call.1} parent=51 // pred_fallthru
          _
        %v437 = vld [vmem:[%s359] sm:$0x3]
        %v438 = vld [vmem:[%s4] sm:$0xff]
        %v439 = vld [vmem:[%s4 + $0x8] sm:$0xff]
        %v440 = vld [vmem:[%s4 + $0x10] sm:$0xff]
        %v441 = vld [vmem:[%s4 + $0x18] sm:$0xff]
        %443 = vset.pattern.permute.xlu0 0
        %444 = vperm.xlu0 %443, %v438
        %v445 = vpop.permute.xlu0 %444
        %448 = vset.pattern.permute.xlu0 0
        %449 = vperm.xlu0 %448, %v439
        %v450 = vpop.permute.xlu0 %449
        %453 = vset.pattern.permute.xlu0 0
        %454 = vperm.xlu0 %453, %v440
        %v455 = vpop.permute.xlu0 %454
        %458 = vset.pattern.permute.xlu0 0
        %459 = vperm.xlu0 %458, %v441
        %v460 = vpop.permute.xlu0 %459
        %v463 = vlaneseq
        %v464 = vshrl.u32 %v463, 7
        %v465 = vsub.s32 0, %v464
        %v466 = vrot.slane %v437, %v465
        %v467 = vlaneseq
        %v468 = vshrl.u32 %v467, 7
        %v469 = vsub.s32 1, %v468
        %v470 = vrot.slane %v437, %v469
        %v473 = vmul.f32 %v445, %v466
        %v474 = vmul.f32 %v445, %v470
        %v475 = vmul.f32 %v450, %v466
        %v476 = vmul.f32 %v450, %v470
        %v477 = vmul.f32 %v455, %v466
        %v478 = vmul.f32 %v455, %v470
        %v479 = vmul.f32 %v460, %v466
        %v480 = vmul.f32 %v460, %v470
        %v481 = vld [vmem:[%s5] sm:$0xff]
        %v482 = vld [vmem:[%s5 + $0x8] sm:$0xff]
        %v483 = vld [vmem:[%s5 + $0x10] sm:$0xff]
        %v484 = vld [vmem:[%s5 + $0x18] sm:$0xff]
        %486 = vset.pattern.permute.xlu0 0
        %487 = vperm.xlu0 %486, %v481
        %v488 = vpop.permute.xlu0 %487
        %491 = vset.pattern.permute.xlu0 0
        %492 = vperm.xlu0 %491, %v482
        %v493 = vpop.permute.xlu0 %492
        %496 = vset.pattern.permute.xlu0 0
        %497 = vperm.xlu0 %496, %v483
        %v498 = vpop.permute.xlu0 %497
        %501 = vset.pattern.permute.xlu0 0
        %502 = vperm.xlu0 %501, %v484
        %v503 = vpop.permute.xlu0 %502
        %v505 = vadd.f32 %v473, %v488
        %v506 = vadd.f32 %v474, %v488
        %v507 = vadd.f32 %v475, %v493
        %v508 = vadd.f32 %v476, %v493
        %v509 = vadd.f32 %v477, %v498
        %v510 = vadd.f32 %v478, %v498
        %v511 = vadd.f32 %v479, %v503
        %v512 = vadd.f32 %v480, %v503
        %v513 = vmax.f32 %v505, 0.0
        %v514 = vmax.f32 %v506, 0.0
        %v515 = vmax.f32 %v507, 0.0
        %v516 = vmax.f32 %v508, 0.0
        %v517 = vmax.f32 %v509, 0.0
        %v518 = vmax.f32 %v510, 0.0
        %v519 = vmax.f32 %v511, 0.0
        %v520 = vmax.f32 %v512, 0.0
        %v521 = vld [vmem:[%s6] sm:$0xff]
        %v522 = vld [vmem:[%s6 + $0x8] sm:$0xff]
        %v523 = vld [vmem:[%s6 + $0x10] sm:$0xff]
        %v524 = vld [vmem:[%s6 + $0x18] sm:$0xff]
        %526 = vset.pattern.permute.xlu0 0
        %527 = vperm.xlu0 %526, %v521
        %v528 = vpop.permute.xlu0 %527
        %531 = vset.pattern.permute.xlu0 0
        %532 = vperm.xlu0 %531, %v522
        %v533 = vpop.permute.xlu0 %532
        %536 = vset.pattern.permute.xlu0 0
        %537 = vperm.xlu0 %536, %v523
        %v538 = vpop.permute.xlu0 %537
        %541 = vset.pattern.permute.xlu0 0
        %542 = vperm.xlu0 %541, %v524
        %v543 = vpop.permute.xlu0 %542
        %v545 = vmul.f32 %v513, %v528
        %v546 = vmul.f32 %v514, %v528
        %v547 = vmul.f32 %v515, %v533
        %v548 = vmul.f32 %v516, %v533
        %v549 = vmul.f32 %v517, %v538
        %v550 = vmul.f32 %v518, %v538
        %v551 = vmul.f32 %v519, %v543
        %v552 = vmul.f32 %v520, %v543
        %v553 = vadd.f32 %v545, %v547
        %v554 = vadd.f32 %v553, %v549
        %v555 = vadd.f32 %v554, %v551
        %v556 = vrot.slane %v555, 4
        %v557 = vadd.f32 %v555, %v556
        %v558 = vrot.slane %v557, 2
        %v559 = vadd.f32 %v557, %v558
        %v560 = vrot.slane %v559, 1
        %v561 = vadd.f32 %v559, %v560
        %v562 = vadd.f32 %v546, %v548
        %v563 = vadd.f32 %v562, %v550
        %v564 = vadd.f32 %v563, %v552
        %v565 = vrot.slane %v564, 4
        %v566 = vadd.f32 %v564, %v565
        %v567 = vrot.slane %v566, 2
        %v568 = vadd.f32 %v566, %v567
        %v569 = vrot.slane %v568, 1
        %v570 = vadd.f32 %v568, %v569
        %v571 = vld [vmem:[#allocation4] sm:$0x1]
        %573 = vset.pattern.permute.xlu0 0
        %574 = vperm.xlu0 %573, %v571
        %v575 = vpop.permute.xlu0 %574
        %v577 = vlaneseq
        %v578 = vshrl.u32 %v577, 7
        %v579 = vsub.s32 0, %v578
        %v580 = vrot.slane %v575, %v579
        %v581 = vadd.f32 %v561, %v580
        %v582 = vadd.f32 %v570, %v580
        %v583 = vxor.u32 %v581, 2147483648
        %v584 = vxor.u32 %v582, 2147483648
        %v585 = vmul.f32 %v583, 1.442695
        %v586 = vpow.pop %v585
        %v587 = vmul.f32 %v584, 1.442695
        %v588 = vpow.pop %v587
        %v589 = vadd.f32 %v586, 1.0
        %v590 = vadd.f32 %v588, 1.0
        %v591 = vrcp.pop %v589
        %v592 = vmul.f32 1.0, %v591
        %v593 = vrcp.pop %v590
        %v594 = vmul.f32 1.0, %v593
        %v595 = vpack.c.bf16 %v592, %v592
        %v596 = vpack.c.bf16 %v594, %v594
        %v597 = vunpack.c.l.bf16 %v595
        %v598 = vunpack.c.l.bf16 %v596
        %v599 = vsub.f32 %v592, %v597
        %v600 = vsub.f32 %v594, %v598
        %v601 = vlaneseq
        %v602 = vshrl.u32 %v601, 7
        %v603 = vadd.s32 %v602, 8
        %v604 = vadd.s32 %v602, 16
        %v605 = vadd.s32 %v602, 24
        %v606 = vadd.s32 %v602, 32
        %v607 = vadd.s32 %v602, 40
        %v608 = vadd.s32 %v602, 48
        %v609 = vadd.s32 %v602, 56
        %v610 = vadd.s32 %v602, 64
        %v611 = vadd.s32 %v602, 72
        %v612 = vadd.s32 %v602, 80
        %v613 = vadd.s32 %v602, 88
        %v614 = vadd.s32 %v602, 96
        %v615 = vadd.s32 %v602, 104
        %v616 = vadd.s32 %v602, 112
        %v617 = vadd.s32 %v602, 120
        %v618 = vstv %s378
        %v619 = vadd.s32 %v618, %v602
        %v620 = vadd.s32 %v618, %v603
        %v621 = vadd.s32 %v618, %v604
        %v622 = vadd.s32 %v618, %v605
        %v623 = vadd.s32 %v618, %v606
        %v624 = vadd.s32 %v618, %v607
        %v625 = vadd.s32 %v618, %v608
        %v626 = vadd.s32 %v618, %v609
        %v627 = vadd.s32 %v618, %v610
        %v628 = vadd.s32 %v618, %v611
        %v629 = vadd.s32 %v618, %v612
        %v630 = vadd.s32 %v618, %v613
        %v631 = vadd.s32 %v618, %v614
        %v632 = vadd.s32 %v618, %v615
        %v633 = vadd.s32 %v618, %v616
        %v634 = vadd.s32 %v618, %v617
        %v635 = vld [vmem:[%s364] sm:$0x3]
        %v636 = vlaneseq
        %v637 = vshrl.u32 %v636, 7
        %v638 = vsub.s32 0, %v637
        %v639 = vrot.slane %v635, %v638
        %v640 = vlaneseq
        %v641 = vshrl.u32 %v640, 7
        %v642 = vsub.s32 1, %v641
        %v643 = vrot.slane %v635, %v642
        %vm644 = vcmp.eq.s32.totalorder %v639, %v619
        %vm645 = vcmp.eq.s32.totalorder %v643, %v619
        %vm646 = vcmp.eq.s32.totalorder %v639, %v620
        %vm647 = vcmp.eq.s32.totalorder %v643, %v620
        %vm648 = vcmp.eq.s32.totalorder %v639, %v621
        %vm649 = vcmp.eq.s32.totalorder %v643, %v621
        %vm650 = vcmp.eq.s32.totalorder %v639, %v622
        %vm651 = vcmp.eq.s32.totalorder %v643, %v622
        %vm652 = vcmp.eq.s32.totalorder %v639, %v623
        %vm653 = vcmp.eq.s32.totalorder %v643, %v623
        %vm654 = vcmp.eq.s32.totalorder %v639, %v624
        %vm655 = vcmp.eq.s32.totalorder %v643, %v624
        %vm656 = vcmp.eq.s32.totalorder %v639, %v625
        %vm657 = vcmp.eq.s32.totalorder %v643, %v625
        %vm658 = vcmp.eq.s32.totalorder %v639, %v626
        %vm659 = vcmp.eq.s32.totalorder %v643, %v626
        %vm660 = vcmp.eq.s32.totalorder %v639, %v627
        %vm661 = vcmp.eq.s32.totalorder %v643, %v627
        %vm662 = vcmp.eq.s32.totalorder %v639, %v628
        %vm663 = vcmp.eq.s32.totalorder %v643, %v628
        %vm664 = vcmp.eq.s32.totalorder %v639, %v629
        %vm665 = vcmp.eq.s32.totalorder %v643, %v629
        %vm666 = vcmp.eq.s32.totalorder %v639, %v630
        %vm667 = vcmp.eq.s32.totalorder %v643, %v630
        %vm668 = vcmp.eq.s32.totalorder %v639, %v631
        %vm669 = vcmp.eq.s32.totalorder %v643, %v631
        %vm670 = vcmp.eq.s32.totalorder %v639, %v632
        %vm671 = vcmp.eq.s32.totalorder %v643, %v632
        %vm672 = vcmp.eq.s32.totalorder %v639, %v633
        %vm673 = vcmp.eq.s32.totalorder %v643, %v633
        %vm674 = vcmp.eq.s32.totalorder %v639, %v634
        %vm675 = vcmp.eq.s32.totalorder %v643, %v634
        %v676 = vsel %vm644, %v597, 0.0
        %v677 = vsel %vm645, %v598, 0.0
        %v678 = vsel %vm646, %v597, 0.0
        %v679 = vsel %vm647, %v598, 0.0
        %v680 = vsel %vm648, %v597, 0.0
        %v681 = vsel %vm649, %v598, 0.0
        %v682 = vsel %vm650, %v597, 0.0
        %v683 = vsel %vm651, %v598, 0.0
        %v684 = vsel %vm652, %v597, 0.0
        %v685 = vsel %vm653, %v598, 0.0
        %v686 = vsel %vm654, %v597, 0.0
        %v687 = vsel %vm655, %v598, 0.0
        %v688 = vsel %vm656, %v597, 0.0
        %v689 = vsel %vm657, %v598, 0.0
        %v690 = vsel %vm658, %v597, 0.0
        %v691 = vsel %vm659, %v598, 0.0
        %v692 = vsel %vm660, %v597, 0.0
        %v693 = vsel %vm661, %v598, 0.0
        %v694 = vsel %vm662, %v597, 0.0
        %v695 = vsel %vm663, %v598, 0.0
        %v696 = vsel %vm664, %v597, 0.0
        %v697 = vsel %vm665, %v598, 0.0
        %v698 = vsel %vm666, %v597, 0.0
        %v699 = vsel %vm667, %v598, 0.0
        %v700 = vsel %vm668, %v597, 0.0
        %v701 = vsel %vm669, %v598, 0.0
        %v702 = vsel %vm670, %v597, 0.0
        %v703 = vsel %vm671, %v598, 0.0
        %v704 = vsel %vm672, %v597, 0.0
        %v705 = vsel %vm673, %v598, 0.0
        %v706 = vsel %vm674, %v597, 0.0
        %v707 = vsel %vm675, %v598, 0.0
        %v708 = vpack.c.bf16 %v678, %v676
        %v709 = vpack.c.bf16 %v679, %v677
        %v710 = vpack.c.bf16 %v682, %v680
        %v711 = vpack.c.bf16 %v683, %v681
        %v712 = vpack.c.bf16 %v686, %v684
        %v713 = vpack.c.bf16 %v687, %v685
        %v714 = vpack.c.bf16 %v690, %v688
        %v715 = vpack.c.bf16 %v691, %v689
        %v716 = vpack.c.bf16 %v694, %v692
        %v717 = vpack.c.bf16 %v695, %v693
        %v718 = vpack.c.bf16 %v698, %v696
        %v719 = vpack.c.bf16 %v699, %v697
        %v720 = vpack.c.bf16 %v702, %v700
        %v721 = vpack.c.bf16 %v703, %v701
        %v722 = vpack.c.bf16 %v706, %v704
        %v723 = vpack.c.bf16 %v707, %v705
        %v724 = vsel %vm644, %v599, 0.0
        %v725 = vsel %vm645, %v600, 0.0
        %v726 = vsel %vm646, %v599, 0.0
        %v727 = vsel %vm647, %v600, 0.0
        %v728 = vsel %vm648, %v599, 0.0
        %v729 = vsel %vm649, %v600, 0.0
        %v730 = vsel %vm650, %v599, 0.0
        %v731 = vsel %vm651, %v600, 0.0
        %v732 = vsel %vm652, %v599, 0.0
        %v733 = vsel %vm653, %v600, 0.0
        %v734 = vsel %vm654, %v599, 0.0
        %v735 = vsel %vm655, %v600, 0.0
        %v736 = vsel %vm656, %v599, 0.0
        %v737 = vsel %vm657, %v600, 0.0
        %v738 = vsel %vm658, %v599, 0.0
        %v739 = vsel %vm659, %v600, 0.0
        %v740 = vsel %vm660, %v599, 0.0
        %v741 = vsel %vm661, %v600, 0.0
        %v742 = vsel %vm662, %v599, 0.0
        %v743 = vsel %vm663, %v600, 0.0
        %v744 = vsel %vm664, %v599, 0.0
        %v745 = vsel %vm665, %v600, 0.0
        %v746 = vsel %vm666, %v599, 0.0
        %v747 = vsel %vm667, %v600, 0.0
        %v748 = vsel %vm668, %v599, 0.0
        %v749 = vsel %vm669, %v600, 0.0
        %v750 = vsel %vm670, %v599, 0.0
        %v751 = vsel %vm671, %v600, 0.0
        %v752 = vsel %vm672, %v599, 0.0
        %v753 = vsel %vm673, %v600, 0.0
        %v754 = vsel %vm674, %v599, 0.0
        %v755 = vsel %vm675, %v600, 0.0
        %v756 = vpack.c.bf16 %v726, %v724
        %v757 = vpack.c.bf16 %v727, %v725
        %v758 = vpack.c.bf16 %v730, %v728
        %v759 = vpack.c.bf16 %v731, %v729
        %v760 = vpack.c.bf16 %v734, %v732
        %v761 = vpack.c.bf16 %v735, %v733
        %v762 = vpack.c.bf16 %v738, %v736
        %v763 = vpack.c.bf16 %v739, %v737
        %v764 = vpack.c.bf16 %v742, %v740
        %v765 = vpack.c.bf16 %v743, %v741
        %v766 = vpack.c.bf16 %v746, %v744
        %v767 = vpack.c.bf16 %v747, %v745
        %v768 = vpack.c.bf16 %v750, %v748
        %v769 = vpack.c.bf16 %v751, %v749
        %v770 = vpack.c.bf16 %v754, %v752
        %v771 = vpack.c.bf16 %v755, %v753
        %v772 = vlaneseq
        %v773 = vand.u32 %v772, 127
        %v774 = vadd.s32 %v773, 128
        %v775 = vld [vmem:[%s375] sm:$0xff]
        %v776 = vld [vmem:[%s375 + $0x8] sm:$0xff]
        %v777 = vld [vmem:[%s375 + $0x10] sm:$0xff]
        %v778 = vld [vmem:[%s375 + $0x18] sm:$0xff]
        %v779 = vld [vmem:[%s375 + $0x20] sm:$0xff]
        %v780 = vld [vmem:[%s375 + $0x28] sm:$0xff]
        %v781 = vld [vmem:[%s375 + $0x30] sm:$0xff]
        %v782 = vld [vmem:[%s375 + $0x38] sm:$0xff]
        %v783 = vld [vmem:[%s375 + $0x40] sm:$0xff]
        %v784 = vld [vmem:[%s375 + $0x48] sm:$0xff]
        %v785 = vld [vmem:[%s375 + $0x50] sm:$0xff]
        %v786 = vld [vmem:[%s375 + $0x58] sm:$0xff]
        %v787 = vld [vmem:[%s375 + $0x60] sm:$0xff]
        %v788 = vld [vmem:[%s375 + $0x68] sm:$0xff]
        %v789 = vld [vmem:[%s375 + $0x70] sm:$0xff]
        %v790 = vld [vmem:[%s375 + $0x78] sm:$0xff]
        %v791 = vld [vmem:[%s375 + $0x80] sm:$0xff]
        %v792 = vld [vmem:[%s375 + $0x88] sm:$0xff]
        %v793 = vld [vmem:[%s375 + $0x90] sm:$0xff]
        %v794 = vld [vmem:[%s375 + $0x98] sm:$0xff]
        %v795 = vld [vmem:[%s375 + $0xa0] sm:$0xff]
        %v796 = vld [vmem:[%s375 + $0xa8] sm:$0xff]
        %v797 = vld [vmem:[%s375 + $0xb0] sm:$0xff]
        %v798 = vld [vmem:[%s375 + $0xb8] sm:$0xff]
        %v799 = vld [vmem:[%s375 + $0xc0] sm:$0xff]
        %v800 = vld [vmem:[%s375 + $0xc8] sm:$0xff]
        %v801 = vld [vmem:[%s375 + $0xd0] sm:$0xff]
        %v802 = vld [vmem:[%s375 + $0xd8] sm:$0xff]
        %v803 = vld [vmem:[%s375 + $0xe0] sm:$0xff]
        %v804 = vld [vmem:[%s375 + $0xe8] sm:$0xff]
        %v805 = vld [vmem:[%s375 + $0xf0] sm:$0xff]
        %v806 = vld [vmem:[%s375 + $0xf8] sm:$0xff]
        %807 = vset.pattern.permute.xlu0 0
        %808 = vperm.xlu0 %807, %v775
        %v809 = vpop.permute.xlu0 %808
        %810 = vset.pattern.permute.xlu0 0
        %811 = vperm.xlu0 %810, %v776
        %v812 = vpop.permute.xlu0 %811
        %813 = vset.pattern.permute.xlu0 0
        %814 = vperm.xlu0 %813, %v777
        %v815 = vpop.permute.xlu0 %814
        %816 = vset.pattern.permute.xlu0 0
        %817 = vperm.xlu0 %816, %v778
        %v818 = vpop.permute.xlu0 %817
        %819 = vset.pattern.permute.xlu0 0
        %820 = vperm.xlu0 %819, %v779
        %v821 = vpop.permute.xlu0 %820
        %822 = vset.pattern.permute.xlu0 0
        %823 = vperm.xlu0 %822, %v780
        %v824 = vpop.permute.xlu0 %823
        %825 = vset.pattern.permute.xlu0 0
        %826 = vperm.xlu0 %825, %v781
        %v827 = vpop.permute.xlu0 %826
        %828 = vset.pattern.permute.xlu0 0
        %829 = vperm.xlu0 %828, %v782
        %v830 = vpop.permute.xlu0 %829
        %831 = vset.pattern.permute.xlu0 0
        %832 = vperm.xlu0 %831, %v783
        %v833 = vpop.permute.xlu0 %832
        %834 = vset.pattern.permute.xlu0 0
        %835 = vperm.xlu0 %834, %v784
        %v836 = vpop.permute.xlu0 %835
        %837 = vset.pattern.permute.xlu0 0
        %838 = vperm.xlu0 %837, %v785
        %v839 = vpop.permute.xlu0 %838
        %840 = vset.pattern.permute.xlu0 0
        %841 = vperm.xlu0 %840, %v786
        %v842 = vpop.permute.xlu0 %841
        %843 = vset.pattern.permute.xlu0 0
        %844 = vperm.xlu0 %843, %v787
        %v845 = vpop.permute.xlu0 %844
        %846 = vset.pattern.permute.xlu0 0
        %847 = vperm.xlu0 %846, %v788
        %v848 = vpop.permute.xlu0 %847
        %849 = vset.pattern.permute.xlu0 0
        %850 = vperm.xlu0 %849, %v789
        %v851 = vpop.permute.xlu0 %850
        %852 = vset.pattern.permute.xlu0 0
        %853 = vperm.xlu0 %852, %v790
        %v854 = vpop.permute.xlu0 %853
        %855 = vset.pattern.permute.xlu0 0
        %856 = vperm.xlu0 %855, %v791
        %v857 = vpop.permute.xlu0 %856
        %858 = vset.pattern.permute.xlu0 0
        %859 = vperm.xlu0 %858, %v792
        %v860 = vpop.permute.xlu0 %859
        %861 = vset.pattern.permute.xlu0 0
        %862 = vperm.xlu0 %861, %v793
        %v863 = vpop.permute.xlu0 %862
        %864 = vset.pattern.permute.xlu0 0
        %865 = vperm.xlu0 %864, %v794
        %v866 = vpop.permute.xlu0 %865
        %867 = vset.pattern.permute.xlu0 0
        %868 = vperm.xlu0 %867, %v795
        %v869 = vpop.permute.xlu0 %868
        %870 = vset.pattern.permute.xlu0 0
        %871 = vperm.xlu0 %870, %v796
        %v872 = vpop.permute.xlu0 %871
        %873 = vset.pattern.permute.xlu0 0
        %874 = vperm.xlu0 %873, %v797
        %v875 = vpop.permute.xlu0 %874
        %876 = vset.pattern.permute.xlu0 0
        %877 = vperm.xlu0 %876, %v798
        %v878 = vpop.permute.xlu0 %877
        %879 = vset.pattern.permute.xlu0 0
        %880 = vperm.xlu0 %879, %v799
        %v881 = vpop.permute.xlu0 %880
        %882 = vset.pattern.permute.xlu0 0
        %883 = vperm.xlu0 %882, %v800
        %v884 = vpop.permute.xlu0 %883
        %885 = vset.pattern.permute.xlu0 0
        %886 = vperm.xlu0 %885, %v801
        %v887 = vpop.permute.xlu0 %886
        %888 = vset.pattern.permute.xlu0 0
        %889 = vperm.xlu0 %888, %v802
        %v890 = vpop.permute.xlu0 %889
        %891 = vset.pattern.permute.xlu0 0
        %892 = vperm.xlu0 %891, %v803
        %v893 = vpop.permute.xlu0 %892
        %894 = vset.pattern.permute.xlu0 0
        %895 = vperm.xlu0 %894, %v804
        %v896 = vpop.permute.xlu0 %895
        %897 = vset.pattern.permute.xlu0 0
        %898 = vperm.xlu0 %897, %v805
        %v899 = vpop.permute.xlu0 %898
        %900 = vset.pattern.permute.xlu0 0
        %901 = vperm.xlu0 %900, %v806
        %v902 = vpop.permute.xlu0 %901
        %vm903 = vcmp.eq.s32.totalorder %v809, %v773
        %vm904 = vcmp.eq.s32.totalorder %v809, %v774
        %vm905 = vcmp.eq.s32.totalorder %v812, %v773
        %vm906 = vcmp.eq.s32.totalorder %v812, %v774
        %vm907 = vcmp.eq.s32.totalorder %v815, %v773
        %vm908 = vcmp.eq.s32.totalorder %v815, %v774
        %vm909 = vcmp.eq.s32.totalorder %v818, %v773
        %vm910 = vcmp.eq.s32.totalorder %v818, %v774
        %vm911 = vcmp.eq.s32.totalorder %v821, %v773
        %vm912 = vcmp.eq.s32.totalorder %v821, %v774
        %vm913 = vcmp.eq.s32.totalorder %v824, %v773
        %vm914 = vcmp.eq.s32.totalorder %v824, %v774
        %vm915 = vcmp.eq.s32.totalorder %v827, %v773
        %vm916 = vcmp.eq.s32.totalorder %v827, %v774
        %vm917 = vcmp.eq.s32.totalorder %v830, %v773
        %vm918 = vcmp.eq.s32.totalorder %v830, %v774
        %vm919 = vcmp.eq.s32.totalorder %v833, %v773
        %vm920 = vcmp.eq.s32.totalorder %v833, %v774
        %vm921 = vcmp.eq.s32.totalorder %v836, %v773
        %vm922 = vcmp.eq.s32.totalorder %v836, %v774
        %vm923 = vcmp.eq.s32.totalorder %v839, %v773
        %vm924 = vcmp.eq.s32.totalorder %v839, %v774
        %vm925 = vcmp.eq.s32.totalorder %v842, %v773
        %vm926 = vcmp.eq.s32.totalorder %v842, %v774
        %vm927 = vcmp.eq.s32.totalorder %v845, %v773
        %vm928 = vcmp.eq.s32.totalorder %v845, %v774
        %vm929 = vcmp.eq.s32.totalorder %v848, %v773
        %vm930 = vcmp.eq.s32.totalorder %v848, %v774
        %vm931 = vcmp.eq.s32.totalorder %v851, %v773
        %vm932 = vcmp.eq.s32.totalorder %v851, %v774
        %vm933 = vcmp.eq.s32.totalorder %v854, %v773
        %vm934 = vcmp.eq.s32.totalorder %v854, %v774
        %vm935 = vcmp.eq.s32.totalorder %v857, %v773
        %vm936 = vcmp.eq.s32.totalorder %v857, %v774
        %vm937 = vcmp.eq.s32.totalorder %v860, %v773
        %vm938 = vcmp.eq.s32.totalorder %v860, %v774
        %vm939 = vcmp.eq.s32.totalorder %v863, %v773
        %vm940 = vcmp.eq.s32.totalorder %v863, %v774
        %vm941 = vcmp.eq.s32.totalorder %v866, %v773
        %vm942 = vcmp.eq.s32.totalorder %v866, %v774
        %vm943 = vcmp.eq.s32.totalorder %v869, %v773
        %vm944 = vcmp.eq.s32.totalorder %v869, %v774
        %vm945 = vcmp.eq.s32.totalorder %v872, %v773
        %vm946 = vcmp.eq.s32.totalorder %v872, %v774
        %vm947 = vcmp.eq.s32.totalorder %v875, %v773
        %vm948 = vcmp.eq.s32.totalorder %v875, %v774
        %vm949 = vcmp.eq.s32.totalorder %v878, %v773
        %vm950 = vcmp.eq.s32.totalorder %v878, %v774
        %vm951 = vcmp.eq.s32.totalorder %v881, %v773
        %vm952 = vcmp.eq.s32.totalorder %v881, %v774
        %vm953 = vcmp.eq.s32.totalorder %v884, %v773
        %vm954 = vcmp.eq.s32.totalorder %v884, %v774
        %vm955 = vcmp.eq.s32.totalorder %v887, %v773
        %vm956 = vcmp.eq.s32.totalorder %v887, %v774
        %vm957 = vcmp.eq.s32.totalorder %v890, %v773
        %vm958 = vcmp.eq.s32.totalorder %v890, %v774
        %vm959 = vcmp.eq.s32.totalorder %v893, %v773
        %vm960 = vcmp.eq.s32.totalorder %v893, %v774
        %vm961 = vcmp.eq.s32.totalorder %v896, %v773
        %vm962 = vcmp.eq.s32.totalorder %v896, %v774
        %vm963 = vcmp.eq.s32.totalorder %v899, %v773
        %vm964 = vcmp.eq.s32.totalorder %v899, %v774
        %vm965 = vcmp.eq.s32.totalorder %v902, %v773
        %vm966 = vcmp.eq.s32.totalorder %v902, %v774
        %v967 = vsel %vm903, 1, 0
        %v968 = vsel %vm904, 1, 0
        %v969 = vsel %vm905, 1, 0
        %v970 = vsel %vm906, 1, 0
        %v971 = vsel %vm907, 1, 0
        %v972 = vsel %vm908, 1, 0
        %v973 = vsel %vm909, 1, 0
        %v974 = vsel %vm910, 1, 0
        %v975 = vsel %vm911, 1, 0
        %v976 = vsel %vm912, 1, 0
        %v977 = vsel %vm913, 1, 0
        %v978 = vsel %vm914, 1, 0
        %v979 = vsel %vm915, 1, 0
        %v980 = vsel %vm916, 1, 0
        %v981 = vsel %vm917, 1, 0
        %v982 = vsel %vm918, 1, 0
        %v983 = vsel %vm919, 1, 0
        %v984 = vsel %vm920, 1, 0
        %v985 = vsel %vm921, 1, 0
        %v986 = vsel %vm922, 1, 0
        %v987 = vsel %vm923, 1, 0
        %v988 = vsel %vm924, 1, 0
        %v989 = vsel %vm925, 1, 0
        %v990 = vsel %vm926, 1, 0
        %v991 = vsel %vm927, 1, 0
        %v992 = vsel %vm928, 1, 0
        %v993 = vsel %vm929, 1, 0
        %v994 = vsel %vm930, 1, 0
        %v995 = vsel %vm931, 1, 0
        %v996 = vsel %vm932, 1, 0
        %v997 = vsel %vm933, 1, 0
        %v998 = vsel %vm934, 1, 0
        %v999 = vsel %vm935, 1, 0
        %v1000 = vsel %vm936, 1, 0
        %v1001 = vsel %vm937, 1, 0
        %v1002 = vsel %vm938, 1, 0
        %v1003 = vsel %vm939, 1, 0
        %v1004 = vsel %vm940, 1, 0
        %v1005 = vsel %vm941, 1, 0
        %v1006 = vsel %vm942, 1, 0
        %v1007 = vsel %vm943, 1, 0
        %v1008 = vsel %vm944, 1, 0
        %v1009 = vsel %vm945, 1, 0
        %v1010 = vsel %vm946, 1, 0
        %v1011 = vsel %vm947, 1, 0
        %v1012 = vsel %vm948, 1, 0
        %v1013 = vsel %vm949, 1, 0
        %v1014 = vsel %vm950, 1, 0
        %v1015 = vsel %vm951, 1, 0
        %v1016 = vsel %vm952, 1, 0
        %v1017 = vsel %vm953, 1, 0
        %v1018 = vsel %vm954, 1, 0
        %v1019 = vsel %vm955, 1, 0
        %v1020 = vsel %vm956, 1, 0
        %v1021 = vsel %vm957, 1, 0
        %v1022 = vsel %vm958, 1, 0
        %v1023 = vsel %vm959, 1, 0
        %v1024 = vsel %vm960, 1, 0
        %v1025 = vsel %vm961, 1, 0
        %v1026 = vsel %vm962, 1, 0
        %v1027 = vsel %vm963, 1, 0
        %v1028 = vsel %vm964, 1, 0
        %v1029 = vsel %vm965, 1, 0
        %v1030 = vsel %vm966, 1, 0
        %v1031 = vcvt.s32.f32 %v967
        %v1032 = vcvt.s32.f32 %v968
        %v1033 = vcvt.s32.f32 %v969
        %v1034 = vcvt.s32.f32 %v970
        %v1035 = vcvt.s32.f32 %v971
        %v1036 = vcvt.s32.f32 %v972
        %v1037 = vcvt.s32.f32 %v973
        %v1038 = vcvt.s32.f32 %v974
        %v1039 = vcvt.s32.f32 %v975
        %v1040 = vcvt.s32.f32 %v976
        %v1041 = vcvt.s32.f32 %v977
        %v1042 = vcvt.s32.f32 %v978
        %v1043 = vcvt.s32.f32 %v979
        %v1044 = vcvt.s32.f32 %v980
        %v1045 = vcvt.s32.f32 %v981
        %v1046 = vcvt.s32.f32 %v982
        %v1047 = vcvt.s32.f32 %v983
        %v1048 = vcvt.s32.f32 %v984
        %v1049 = vcvt.s32.f32 %v985
        %v1050 = vcvt.s32.f32 %v986
        %v1051 = vcvt.s32.f32 %v987
        %v1052 = vcvt.s32.f32 %v988
        %v1053 = vcvt.s32.f32 %v989
        %v1054 = vcvt.s32.f32 %v990
        %v1055 = vcvt.s32.f32 %v991
        %v1056 = vcvt.s32.f32 %v992
        %v1057 = vcvt.s32.f32 %v993
        %v1058 = vcvt.s32.f32 %v994
        %v1059 = vcvt.s32.f32 %v995
        %v1060 = vcvt.s32.f32 %v996
        %v1061 = vcvt.s32.f32 %v997
        %v1062 = vcvt.s32.f32 %v998
        %v1063 = vcvt.s32.f32 %v999
        %v1064 = vcvt.s32.f32 %v1000
        %v1065 = vcvt.s32.f32 %v1001
        %v1066 = vcvt.s32.f32 %v1002
        %v1067 = vcvt.s32.f32 %v1003
        %v1068 = vcvt.s32.f32 %v1004
        %v1069 = vcvt.s32.f32 %v1005
        %v1070 = vcvt.s32.f32 %v1006
        %v1071 = vcvt.s32.f32 %v1007
        %v1072 = vcvt.s32.f32 %v1008
        %v1073 = vcvt.s32.f32 %v1009
        %v1074 = vcvt.s32.f32 %v1010
        %v1075 = vcvt.s32.f32 %v1011
        %v1076 = vcvt.s32.f32 %v1012
        %v1077 = vcvt.s32.f32 %v1013
        %v1078 = vcvt.s32.f32 %v1014
        %v1079 = vcvt.s32.f32 %v1015
        %v1080 = vcvt.s32.f32 %v1016
        %v1081 = vcvt.s32.f32 %v1017
        %v1082 = vcvt.s32.f32 %v1018
        %v1083 = vcvt.s32.f32 %v1019
        %v1084 = vcvt.s32.f32 %v1020
        %v1085 = vcvt.s32.f32 %v1021
        %v1086 = vcvt.s32.f32 %v1022
        %v1087 = vcvt.s32.f32 %v1023
        %v1088 = vcvt.s32.f32 %v1024
        %v1089 = vcvt.s32.f32 %v1025
        %v1090 = vcvt.s32.f32 %v1026
        %v1091 = vcvt.s32.f32 %v1027
        %v1092 = vcvt.s32.f32 %v1028
        %v1093 = vcvt.s32.f32 %v1029
        %v1094 = vcvt.s32.f32 %v1030
        %v1095 = vpack.c.bf16 %v1033, %v1031
        %v1096 = vpack.c.bf16 %v1034, %v1032
        %v1097 = vpack.c.bf16 %v1037, %v1035
        %v1098 = vpack.c.bf16 %v1038, %v1036
        %v1099 = vpack.c.bf16 %v1041, %v1039
        %v1100 = vpack.c.bf16 %v1042, %v1040
        %v1101 = vpack.c.bf16 %v1045, %v1043
        %v1102 = vpack.c.bf16 %v1046, %v1044
        %v1103 = vpack.c.bf16 %v1049, %v1047
        %v1104 = vpack.c.bf16 %v1050, %v1048
        %v1105 = vpack.c.bf16 %v1053, %v1051
        %v1106 = vpack.c.bf16 %v1054, %v1052
        %v1107 = vpack.c.bf16 %v1057, %v1055
        %v1108 = vpack.c.bf16 %v1058, %v1056
        %v1109 = vpack.c.bf16 %v1061, %v1059
        %v1110 = vpack.c.bf16 %v1062, %v1060
        %v1111 = vpack.c.bf16 %v1065, %v1063
        %v1112 = vpack.c.bf16 %v1066, %v1064
        %v1113 = vpack.c.bf16 %v1069, %v1067
        %v1114 = vpack.c.bf16 %v1070, %v1068
        %v1115 = vpack.c.bf16 %v1073, %v1071
        %v1116 = vpack.c.bf16 %v1074, %v1072
        %v1117 = vpack.c.bf16 %v1077, %v1075
        %v1118 = vpack.c.bf16 %v1078, %v1076
        %v1119 = vpack.c.bf16 %v1081, %v1079
        %v1120 = vpack.c.bf16 %v1082, %v1080
        %v1121 = vpack.c.bf16 %v1085, %v1083
        %v1122 = vpack.c.bf16 %v1086, %v1084
        %v1123 = vpack.c.bf16 %v1089, %v1087
        %v1124 = vpack.c.bf16 %v1090, %v1088
        %v1125 = vpack.c.bf16 %v1093, %v1091
        %v1126 = vpack.c.bf16 %v1094, %v1092
        %1127 = vmatprep.subr.bf16.mxu0 %v1096
        %1128 = vmatpush1.bf16.msra.mxu0 %v1095
        %1129 = vmatprep.subr.bf16.mxu0 %v1098
        %1130 = vmatpush1.bf16.msra.mxu0 %v1097
        %1131 = vmatprep.subr.bf16.mxu0 %v1100
        %1132 = vmatpush1.bf16.msra.mxu0 %v1099
        %1133 = vmatprep.subr.bf16.mxu0 %v1102
        %1134 = vmatpush1.bf16.msra.mxu0 %v1101
        %1135 = vmatprep.subr.bf16.mxu0 %v1104
        %1136 = vmatpush1.bf16.msra.mxu0 %v1103
        %1137 = vmatprep.subr.bf16.mxu0 %v1106
        %1138 = vmatpush1.bf16.msra.mxu0 %v1105
        %1139 = vmatprep.subr.bf16.mxu0 %v1108
        %1140 = vmatpush1.bf16.msra.mxu0 %v1107
        %1141 = vmatprep.subr.bf16.mxu0 %v1110
        %1142 = vmatpush1.bf16.msra.mxu0 %v1109
        %1143 = vmatprep.subr.bf16.mxu0 %v1112
        %1144 = vmatpush1.bf16.msra.mxu0 %v1111
        %1145 = vmatprep.subr.bf16.mxu0 %v1114
        %1146 = vmatpush1.bf16.msra.mxu0 %v1113
        %1147 = vmatprep.subr.bf16.mxu0 %v1116
        %1148 = vmatpush1.bf16.msra.mxu0 %v1115
        %1149 = vmatprep.subr.bf16.mxu0 %v1118
        %1150 = vmatpush1.bf16.msra.mxu0 %v1117
        %1151 = vmatprep.subr.bf16.mxu0 %v1120
        %1152 = vmatpush1.bf16.msra.mxu0 %v1119
        %1153 = vmatprep.subr.bf16.mxu0 %v1122
        %1154 = vmatpush1.bf16.msra.mxu0 %v1121
        %1155 = vmatprep.subr.bf16.mxu0 %v1124
        %1156 = vmatpush1.bf16.msra.mxu0 %v1123
        %1157 = vmatprep.subr.bf16.mxu0 %v1126
        %1158 = vmatpush1.bf16.msra.mxu0 %v1125
        %1159 = vmatprep.mubr.bf16.mxu0 %v757
        %1160 = vmatmul.mubr.bf16.gmra.mrb[0].mxu0 %v756
        %v1161 = vpop.f32.mrb[0].mxu0
        %v1162 = vadd.f32 0.0, %v1161
        %v1163 = vpop.f32.mrb[0].mxu0
        %v1164 = vadd.f32 0.0, %v1163
        %v1165 = vpop.f32.mrb[0].mxu0
        %v1166 = vadd.f32 0.0, %v1165
        %v1167 = vpop.f32.mrb[0].mxu0
        %v1168 = vadd.f32 0.0, %v1167
        %1169 = vmatprep.mubr.bf16.mxu0 %v759
        %1170 = vmatmul.mubr.bf16.gmra.mrb[0].mxu0 %v758
        %v1171 = vpop.f32.mrb[0].mxu0
        %v1172 = vadd.f32 0.0, %v1171
        %v1173 = vpop.f32.mrb[0].mxu0
        %v1174 = vadd.f32 0.0, %v1173
        %v1175 = vpop.f32.mrb[0].mxu0
        %v1176 = vadd.f32 0.0, %v1175
        %v1177 = vpop.f32.mrb[0].mxu0
        %v1178 = vadd.f32 0.0, %v1177
        %1179 = vmatprep.mubr.bf16.mxu0 %v761
        %1180 = vmatmul.mubr.bf16.gmra.mrb[0].mxu0 %v760
        %v1181 = vpop.f32.mrb[0].mxu0
        %v1182 = vadd.f32 0.0, %v1181
        %v1183 = vpop.f32.mrb[0].mxu0
        %v1184 = vadd.f32 0.0, %v1183
        %v1185 = vpop.f32.mrb[0].mxu0
        %v1186 = vadd.f32 0.0, %v1185
        %v1187 = vpop.f32.mrb[0].mxu0
        %v1188 = vadd.f32 0.0, %v1187
        %1189 = vmatprep.mubr.bf16.mxu0 %v763
        %1190 = vmatmul.mubr.bf16.gmra.mrb[0].mxu0 %v762
        %v1191 = vpop.f32.mrb[0].mxu0
        %v1192 = vadd.f32 0.0, %v1191
        %v1193 = vpop.f32.mrb[0].mxu0
        %v1194 = vadd.f32 0.0, %v1193
        %v1195 = vpop.f32.mrb[0].mxu0
        %v1196 = vadd.f32 0.0, %v1195
        %v1197 = vpop.f32.mrb[0].mxu0
        %v1198 = vadd.f32 0.0, %v1197
        %1199 = vmatprep.mubr.bf16.mxu0 %v765
        %1200 = vmatmul.mubr.bf16.gmra.mrb[0].mxu0 %v764
        %v1201 = vpop.f32.mrb[0].mxu0
        %v1202 = vadd.f32 0.0, %v1201
        %v1203 = vpop.f32.mrb[0].mxu0
        %v1204 = vadd.f32 0.0, %v1203
        %v1205 = vpop.f32.mrb[0].mxu0
        %v1206 = vadd.f32 0.0, %v1205
        %v1207 = vpop.f32.mrb[0].mxu0
        %v1208 = vadd.f32 0.0, %v1207
        %1209 = vmatprep.mubr.bf16.mxu0 %v767
        %1210 = vmatmul.mubr.bf16.gmra.mrb[0].mxu0 %v766
        %v1211 = vpop.f32.mrb[0].mxu0
        %v1212 = vadd.f32 0.0, %v1211
        %v1213 = vpop.f32.mrb[0].mxu0
        %v1214 = vadd.f32 0.0, %v1213
        %v1215 = vpop.f32.mrb[0].mxu0
        %v1216 = vadd.f32 0.0, %v1215
        %v1217 = vpop.f32.mrb[0].mxu0
        %v1218 = vadd.f32 0.0, %v1217
        %1219 = vmatprep.mubr.bf16.mxu0 %v769
        %1220 = vmatmul.mubr.bf16.gmra.mrb[0].mxu0 %v768
        %v1221 = vpop.f32.mrb[0].mxu0
        %v1222 = vadd.f32 0.0, %v1221
        %v1223 = vpop.f32.mrb[0].mxu0
        %v1224 = vadd.f32 0.0, %v1223
        %v1225 = vpop.f32.mrb[0].mxu0
        %v1226 = vadd.f32 0.0, %v1225
        %v1227 = vpop.f32.mrb[0].mxu0
        %v1228 = vadd.f32 0.0, %v1227
        %1229 = vmatprep.mubr.bf16.mxu0 %v771
        %1230 = vmatmul.mubr.bf16.gmra.mrb[0].mxu0 %v770
        %v1231 = vpop.f32.mrb[0].mxu0
        %v1232 = vadd.f32 0.0, %v1231
        %v1233 = vpop.f32.mrb[0].mxu0
        %v1234 = vadd.f32 0.0, %v1233
        %v1235 = vpop.f32.mrb[0].mxu0
        %v1236 = vadd.f32 0.0, %v1235
        %v1237 = vpop.f32.mrb[0].mxu0
        %v1238 = vadd.f32 0.0, %v1237
        %1239 = vdwg.mxu0
        %1240 = vmatprep.subr.bf16.mxu0 %v1096
        %1241 = vmatpush1.bf16.msra.mxu0 %v1095
        %1242 = vmatprep.subr.bf16.mxu0 %v1098
        %1243 = vmatpush1.bf16.msra.mxu0 %v1097
        %1244 = vmatprep.subr.bf16.mxu0 %v1100
        %1245 = vmatpush1.bf16.msra.mxu0 %v1099
        %1246 = vmatprep.subr.bf16.mxu0 %v1102
        %1247 = vmatpush1.bf16.msra.mxu0 %v1101
        %1248 = vmatprep.subr.bf16.mxu0 %v1104
        %1249 = vmatpush1.bf16.msra.mxu0 %v1103
        %1250 = vmatprep.subr.bf16.mxu0 %v1106
        %1251 = vmatpush1.bf16.msra.mxu0 %v1105
        %1252 = vmatprep.subr.bf16.mxu0 %v1108
        %1253 = vmatpush1.bf16.msra.mxu0 %v1107
        %1254 = vmatprep.subr.bf16.mxu0 %v1110
        %1255 = vmatpush1.bf16.msra.mxu0 %v1109
        %1256 = vmatprep.subr.bf16.mxu0 %v1112
        %1257 = vmatpush1.bf16.msra.mxu0 %v1111
        %1258 = vmatprep.subr.bf16.mxu0 %v1114
        %1259 = vmatpush1.bf16.msra.mxu0 %v1113
        %1260 = vmatprep.subr.bf16.mxu0 %v1116
        %1261 = vmatpush1.bf16.msra.mxu0 %v1115
        %1262 = vmatprep.subr.bf16.mxu0 %v1118
        %1263 = vmatpush1.bf16.msra.mxu0 %v1117
        %1264 = vmatprep.subr.bf16.mxu0 %v1120
        %1265 = vmatpush1.bf16.msra.mxu0 %v1119
        %1266 = vmatprep.subr.bf16.mxu0 %v1122
        %1267 = vmatpush1.bf16.msra.mxu0 %v1121
        %1268 = vmatprep.subr.bf16.mxu0 %v1124
        %1269 = vmatpush1.bf16.msra.mxu0 %v1123
        %1270 = vmatprep.subr.bf16.mxu0 %v1126
        %1271 = vmatpush1.bf16.msra.mxu0 %v1125
        %1272 = vmatprep.mubr.bf16.mxu0 %v709
        %1273 = vmatmul.mubr.bf16.gmra.mrb[0].mxu0 %v708
        %v1274 = vpop.f32.mrb[0].mxu0
        %v1275 = vadd.f32 %v1162, %v1274
        %v1276 = vpop.f32.mrb[0].mxu0
        %v1277 = vadd.f32 %v1164, %v1276
        %v1278 = vpop.f32.mrb[0].mxu0
        %v1279 = vadd.f32 %v1166, %v1278
        %v1280 = vpop.f32.mrb[0].mxu0
        %v1281 = vadd.f32 %v1168, %v1280
        %1282 = vmatprep.mubr.bf16.mxu0 %v711
        %1283 = vmatmul.mubr.bf16.gmra.mrb[0].mxu0 %v710
        %v1284 = vpop.f32.mrb[0].mxu0
        %v1285 = vadd.f32 %v1172, %v1284
        %v1286 = vpop.f32.mrb[0].mxu0
        %v1287 = vadd.f32 %v1174, %v1286
        %v1288 = vpop.f32.mrb[0].mxu0
        %v1289 = vadd.f32 %v1176, %v1288
        %v1290 = vpop.f32.mrb[0].mxu0
        %v1291 = vadd.f32 %v1178, %v1290
        %1292 = vmatprep.mubr.bf16.mxu0 %v713
        %1293 = vmatmul.mubr.bf16.gmra.mrb[0].mxu0 %v712
        %v1294 = vpop.f32.mrb[0].mxu0
        %v1295 = vadd.f32 %v1182, %v1294
        %v1296 = vpop.f32.mrb[0].mxu0
        %v1297 = vadd.f32 %v1184, %v1296
        %v1298 = vpop.f32.mrb[0].mxu0
        %v1299 = vadd.f32 %v1186, %v1298
        %v1300 = vpop.f32.mrb[0].mxu0
        %v1301 = vadd.f32 %v1188, %v1300
        %1302 = vmatprep.mubr.bf16.mxu0 %v715
        %1303 = vmatmul.mubr.bf16.gmra.mrb[0].mxu0 %v714
        %v1304 = vpop.f32.mrb[0].mxu0
        %v1305 = vadd.f32 %v1192, %v1304
        %v1306 = vpop.f32.mrb[0].mxu0
        %v1307 = vadd.f32 %v1194, %v1306
        %v1308 = vpop.f32.mrb[0].mxu0
        %v1309 = vadd.f32 %v1196, %v1308
        %v1310 = vpop.f32.mrb[0].mxu0
        %v1311 = vadd.f32 %v1198, %v1310
        %1312 = vmatprep.mubr.bf16.mxu0 %v717
        %1313 = vmatmul.mubr.bf16.gmra.mrb[0].mxu0 %v716
        %v1314 = vpop.f32.mrb[0].mxu0
        %v1315 = vadd.f32 %v1202, %v1314
        %v1316 = vpop.f32.mrb[0].mxu0
        %v1317 = vadd.f32 %v1204, %v1316
        %v1318 = vpop.f32.mrb[0].mxu0
        %v1319 = vadd.f32 %v1206, %v1318
        %v1320 = vpop.f32.mrb[0].mxu0
        %v1321 = vadd.f32 %v1208, %v1320
        %1322 = vmatprep.mubr.bf16.mxu0 %v719
        %1323 = vmatmul.mubr.bf16.gmra.mrb[0].mxu0 %v718
        %v1324 = vpop.f32.mrb[0].mxu0
        %v1325 = vadd.f32 %v1212, %v1324
        %v1326 = vpop.f32.mrb[0].mxu0
        %v1327 = vadd.f32 %v1214, %v1326
        %v1328 = vpop.f32.mrb[0].mxu0
        %v1329 = vadd.f32 %v1216, %v1328
        %v1330 = vpop.f32.mrb[0].mxu0
        %v1331 = vadd.f32 %v1218, %v1330
        %1332 = vmatprep.mubr.bf16.mxu0 %v721
        %1333 = vmatmul.mubr.bf16.gmra.mrb[0].mxu0 %v720
        %v1334 = vpop.f32.mrb[0].mxu0
        %v1335 = vadd.f32 %v1222, %v1334
        %v1336 = vpop.f32.mrb[0].mxu0
        %v1337 = vadd.f32 %v1224, %v1336
        %v1338 = vpop.f32.mrb[0].mxu0
        %v1339 = vadd.f32 %v1226, %v1338
        %v1340 = vpop.f32.mrb[0].mxu0
        %v1341 = vadd.f32 %v1228, %v1340
        %1342 = vmatprep.mubr.bf16.mxu0 %v723
        %1343 = vmatmul.mubr.bf16.gmra.mrb[0].mxu0 %v722
        %v1344 = vpop.f32.mrb[0].mxu0
        %v1345 = vadd.f32 %v1232, %v1344
        %v1346 = vpop.f32.mrb[0].mxu0
        %v1347 = vadd.f32 %v1234, %v1346
        %v1348 = vpop.f32.mrb[0].mxu0
        %v1349 = vadd.f32 %v1236, %v1348
        %v1350 = vpop.f32.mrb[0].mxu0
        %v1351 = vadd.f32 %v1238, %v1350
        %1352 = vdwg.mxu0
        %v1353 = vld [vmem:[%s355] sm:$0xff]
        %v1354 = vld [vmem:[%s355 + $0x8] sm:$0xff]
        %v1355 = vld [vmem:[%s355 + $0x10] sm:$0xff]
        %v1356 = vld [vmem:[%s355 + $0x18] sm:$0xff]
        %v1357 = vld [vmem:[%s355 + $0x20] sm:$0xff]
        %v1358 = vld [vmem:[%s355 + $0x28] sm:$0xff]
        %v1359 = vld [vmem:[%s355 + $0x30] sm:$0xff]
        %v1360 = vld [vmem:[%s355 + $0x38] sm:$0xff]
        %v1361 = vld [vmem:[%s355 + $0x40] sm:$0xff]
        %v1362 = vld [vmem:[%s355 + $0x48] sm:$0xff]
        %v1363 = vld [vmem:[%s355 + $0x50] sm:$0xff]
        %v1364 = vld [vmem:[%s355 + $0x58] sm:$0xff]
        %v1365 = vld [vmem:[%s355 + $0x60] sm:$0xff]
        %v1366 = vld [vmem:[%s355 + $0x68] sm:$0xff]
        %v1367 = vld [vmem:[%s355 + $0x70] sm:$0xff]
        %v1368 = vld [vmem:[%s355 + $0x78] sm:$0xff]
        %v1369 = vld [vmem:[%s355 + $0x80] sm:$0xff]
        %v1370 = vld [vmem:[%s355 + $0x88] sm:$0xff]
        %v1371 = vld [vmem:[%s355 + $0x90] sm:$0xff]
        %v1372 = vld [vmem:[%s355 + $0x98] sm:$0xff]
        %v1373 = vld [vmem:[%s355 + $0xa0] sm:$0xff]
        %v1374 = vld [vmem:[%s355 + $0xa8] sm:$0xff]
        %v1375 = vld [vmem:[%s355 + $0xb0] sm:$0xff]
        %v1376 = vld [vmem:[%s355 + $0xb8] sm:$0xff]
        %v1377 = vld [vmem:[%s355 + $0xc0] sm:$0xff]
        %v1378 = vld [vmem:[%s355 + $0xc8] sm:$0xff]
        %v1379 = vld [vmem:[%s355 + $0xd0] sm:$0xff]
        %v1380 = vld [vmem:[%s355 + $0xd8] sm:$0xff]
        %v1381 = vld [vmem:[%s355 + $0xe0] sm:$0xff]
        %v1382 = vld [vmem:[%s355 + $0xe8] sm:$0xff]
        %v1383 = vld [vmem:[%s355 + $0xf0] sm:$0xff]
        %v1384 = vld [vmem:[%s355 + $0xf8] sm:$0xff]
        %v1385 = vadd.f32 %v1353, %v1275
        %v1386 = vadd.f32 %v1354, %v1277
        %v1387 = vadd.f32 %v1355, %v1279
        %v1388 = vadd.f32 %v1356, %v1281
        %v1389 = vadd.f32 %v1357, %v1285
        %v1390 = vadd.f32 %v1358, %v1287
        %v1391 = vadd.f32 %v1359, %v1289
        %v1392 = vadd.f32 %v1360, %v1291
        %v1393 = vadd.f32 %v1361, %v1295
        %v1394 = vadd.f32 %v1362, %v1297
        %v1395 = vadd.f32 %v1363, %v1299
        %v1396 = vadd.f32 %v1364, %v1301
        %v1397 = vadd.f32 %v1365, %v1305
        %v1398 = vadd.f32 %v1366, %v1307
        %v1399 = vadd.f32 %v1367, %v1309
        %v1400 = vadd.f32 %v1368, %v1311
        %v1401 = vadd.f32 %v1369, %v1315
        %v1402 = vadd.f32 %v1370, %v1317
        %v1403 = vadd.f32 %v1371, %v1319
        %v1404 = vadd.f32 %v1372, %v1321
        %v1405 = vadd.f32 %v1373, %v1325
        %v1406 = vadd.f32 %v1374, %v1327
        %v1407 = vadd.f32 %v1375, %v1329
        %v1408 = vadd.f32 %v1376, %v1331
        %v1409 = vadd.f32 %v1377, %v1335
        %v1410 = vadd.f32 %v1378, %v1337
        %v1411 = vadd.f32 %v1379, %v1339
        %v1412 = vadd.f32 %v1380, %v1341
        %v1413 = vadd.f32 %v1381, %v1345
        %v1414 = vadd.f32 %v1382, %v1347
        %v1415 = vadd.f32 %v1383, %v1349
        %v1416 = vadd.f32 %v1384, %v1351
        %1417 = vst [vmem:[%s355] sm:$0xff] %v1385
        %1418 = vst [vmem:[%s355 + $0x8] sm:$0xff] %v1386
        %1419 = vst [vmem:[%s355 + $0x10] sm:$0xff] %v1387
        %1420 = vst [vmem:[%s355 + $0x18] sm:$0xff] %v1388
        %1421 = vst [vmem:[%s355 + $0x20] sm:$0xff] %v1389
        %1422 = vst [vmem:[%s355 + $0x28] sm:$0xff] %v1390
        %1423 = vst [vmem:[%s355 + $0x30] sm:$0xff] %v1391
        %1424 = vst [vmem:[%s355 + $0x38] sm:$0xff] %v1392
        %1425 = vst [vmem:[%s355 + $0x40] sm:$0xff] %v1393
        %1426 = vst [vmem:[%s355 + $0x48] sm:$0xff] %v1394
        %1427 = vst [vmem:[%s355 + $0x50] sm:$0xff] %v1395
        %1428 = vst [vmem:[%s355 + $0x58] sm:$0xff] %v1396
        %1429 = vst [vmem:[%s355 + $0x60] sm:$0xff] %v1397
        %1430 = vst [vmem:[%s355 + $0x68] sm:$0xff] %v1398
        %1431 = vst [vmem:[%s355 + $0x70] sm:$0xff] %v1399
        %1432 = vst [vmem:[%s355 + $0x78] sm:$0xff] %v1400
        %1433 = vst [vmem:[%s355 + $0x80] sm:$0xff] %v1401
        %1434 = vst [vmem:[%s355 + $0x88] sm:$0xff] %v1402
        %1435 = vst [vmem:[%s355 + $0x90] sm:$0xff] %v1403
        %1436 = vst [vmem:[%s355 + $0x98] sm:$0xff] %v1404
        %1437 = vst [vmem:[%s355 + $0xa0] sm:$0xff] %v1405
        %1438 = vst [vmem:[%s355 + $0xa8] sm:$0xff] %v1406
        %1439 = vst [vmem:[%s355 + $0xb0] sm:$0xff] %v1407
        %1440 = vst [vmem:[%s355 + $0xb8] sm:$0xff] %v1408
        %1441 = vst [vmem:[%s355 + $0xc0] sm:$0xff] %v1409
        %1442 = vst [vmem:[%s355 + $0xc8] sm:$0xff] %v1410
        %1443 = vst [vmem:[%s355 + $0xd0] sm:$0xff] %v1411
        %1444 = vst [vmem:[%s355 + $0xd8] sm:$0xff] %v1412
        %1445 = vst [vmem:[%s355 + $0xe0] sm:$0xff] %v1413
        %1446 = vst [vmem:[%s355 + $0xe8] sm:$0xff] %v1414
        %1447 = vst [vmem:[%s355 + $0xf0] sm:$0xff] %v1415
        %1448 = vst [vmem:[%s355 + $0xf8] sm:$0xff] %v1416
        %v1449 = vld [vmem:[#allocation2] sm:$0x3]
        %v1450 = vadd.f32 %v1031, %v1033
        %v1451 = vadd.f32 %v1450, %v1035
        %v1452 = vadd.f32 %v1451, %v1037
        %v1453 = vadd.f32 %v1452, %v1039
        %v1454 = vadd.f32 %v1453, %v1041
        %v1455 = vadd.f32 %v1454, %v1043
        %v1456 = vadd.f32 %v1455, %v1045
        %v1457 = vadd.f32 %v1456, %v1047
        %v1458 = vadd.f32 %v1457, %v1049
        %v1459 = vadd.f32 %v1458, %v1051
        %v1460 = vadd.f32 %v1459, %v1053
        %v1461 = vadd.f32 %v1460, %v1055
        %v1462 = vadd.f32 %v1461, %v1057
        %v1463 = vadd.f32 %v1462, %v1059
        %v1464 = vadd.f32 %v1463, %v1061
        %v1465 = vadd.f32 %v1464, %v1063
        %v1466 = vadd.f32 %v1465, %v1065
        %v1467 = vadd.f32 %v1466, %v1067
        %v1468 = vadd.f32 %v1467, %v1069
        %v1469 = vadd.f32 %v1468, %v1071
        %v1470 = vadd.f32 %v1469, %v1073
        %v1471 = vadd.f32 %v1470, %v1075
        %v1472 = vadd.f32 %v1471, %v1077
        %v1473 = vadd.f32 %v1472, %v1079
        %v1474 = vadd.f32 %v1473, %v1081
        %v1475 = vadd.f32 %v1474, %v1083
        %v1476 = vadd.f32 %v1475, %v1085
        %v1477 = vadd.f32 %v1476, %v1087
        %v1478 = vadd.f32 %v1477, %v1089
        %v1479 = vadd.f32 %v1478, %v1091
        %v1480 = vadd.f32 %v1479, %v1093
        %v1481 = vrot.slane %v1480, 4
        %v1482 = vadd.f32 %v1480, %v1481
        %v1483 = vrot.slane %v1482, 2
        %v1484 = vadd.f32 %v1482, %v1483
        %v1485 = vrot.slane %v1484, 1
        %v1486 = vadd.f32 %v1484, %v1485
        %v1487 = vadd.f32 %v1032, %v1034
        %v1488 = vadd.f32 %v1487, %v1036
        %v1489 = vadd.f32 %v1488, %v1038
        %v1490 = vadd.f32 %v1489, %v1040
        %v1491 = vadd.f32 %v1490, %v1042
        %v1492 = vadd.f32 %v1491, %v1044
        %v1493 = vadd.f32 %v1492, %v1046
        %v1494 = vadd.f32 %v1493, %v1048
        %v1495 = vadd.f32 %v1494, %v1050
        %v1496 = vadd.f32 %v1495, %v1052
        %v1497 = vadd.f32 %v1496, %v1054
        %v1498 = vadd.f32 %v1497, %v1056
        %v1499 = vadd.f32 %v1498, %v1058
        %v1500 = vadd.f32 %v1499, %v1060
        %v1501 = vadd.f32 %v1500, %v1062
        %v1502 = vadd.f32 %v1501, %v1064
        %v1503 = vadd.f32 %v1502, %v1066
        %v1504 = vadd.f32 %v1503, %v1068
        %v1505 = vadd.f32 %v1504, %v1070
        %v1506 = vadd.f32 %v1505, %v1072
        %v1507 = vadd.f32 %v1506, %v1074
        %v1508 = vadd.f32 %v1507, %v1076
        %v1509 = vadd.f32 %v1508, %v1078
        %v1510 = vadd.f32 %v1509, %v1080
        %v1511 = vadd.f32 %v1510, %v1082
        %v1512 = vadd.f32 %v1511, %v1084
        %v1513 = vadd.f32 %v1512, %v1086
        %v1514 = vadd.f32 %v1513, %v1088
        %v1515 = vadd.f32 %v1514, %v1090
        %v1516 = vadd.f32 %v1515, %v1092
        %v1517 = vadd.f32 %v1516, %v1094
        %v1518 = vrot.slane %v1517, 4
        %v1519 = vadd.f32 %v1517, %v1518
        %v1520 = vrot.slane %v1519, 2
        %v1521 = vadd.f32 %v1519, %v1520
        %v1522 = vrot.slane %v1521, 1
        %v1523 = vadd.f32 %v1521, %v1522
        %v1526 = vcombine.low %v1486, %v1523
        %v1528 = vunpack.c.l.s4 1966171168
        %v1529 = vunpack.c.0.s8 %v1528
        %v1530 = vlaneseq
        %v1531 = vshrl.u32 %v1530, 7
        %v1532 = vsub.s32 %v1529, %v1531
        %v1533 = vrot.slane %v1526, %v1532
        %v1535 = vunpack.c.l.s4 1966171168
        %v1536 = vunpack.c.0.s8 %v1535
        %v1537 = vlaneseq
        %v1538 = vshrl.u32 %v1537, 7
        %v1539 = vsub.s32 %v1536, %v1538
        %v1540 = vrot.slane %v1533, %v1539
        %v1542 = vadd.f32 %v1449, %v1540
        %v1543 = vlaneseq
        %vm1544 = vcmp.ge.s32.totalorder %v1543, 0
        %vm1545 = vcmp.lt.s32.totalorder %v1543, 256
        %vm1546 = vmand %vm1544, %vm1545
        %1547 = vst.msk [vmem:[#allocation2] sm:$0x3] %vm1546, %v1542
        %v1548 = vld [vmem:[%s369] sm:$0x3]
        %v1549 = vlaneseq
        %v1550 = vshrl.u32 %v1549, 7
        %v1551 = vsub.s32 0, %v1550
        %v1552 = vrot.slane %v1548, %v1551
        %v1553 = vlaneseq
        %v1554 = vshrl.u32 %v1553, 7
        %v1555 = vsub.s32 1, %v1554
        %v1556 = vrot.slane %v1548, %v1555
        %vm1557 = vcmp.eq.s32.totalorder %v1552, %v619
        %vm1558 = vcmp.eq.s32.totalorder %v1556, %v619
        %vm1559 = vcmp.eq.s32.totalorder %v1552, %v620
        %vm1560 = vcmp.eq.s32.totalorder %v1556, %v620
        %vm1561 = vcmp.eq.s32.totalorder %v1552, %v621
        %vm1562 = vcmp.eq.s32.totalorder %v1556, %v621
        %vm1563 = vcmp.eq.s32.totalorder %v1552, %v622
        %vm1564 = vcmp.eq.s32.totalorder %v1556, %v622
        %vm1565 = vcmp.eq.s32.totalorder %v1552, %v623
        %vm1566 = vcmp.eq.s32.totalorder %v1556, %v623
        %vm1567 = vcmp.eq.s32.totalorder %v1552, %v624
        %vm1568 = vcmp.eq.s32.totalorder %v1556, %v624
        %vm1569 = vcmp.eq.s32.totalorder %v1552, %v625
        %vm1570 = vcmp.eq.s32.totalorder %v1556, %v625
        %vm1571 = vcmp.eq.s32.totalorder %v1552, %v626
        %vm1572 = vcmp.eq.s32.totalorder %v1556, %v626
        %vm1573 = vcmp.eq.s32.totalorder %v1552, %v627
        %vm1574 = vcmp.eq.s32.totalorder %v1556, %v627
        %vm1575 = vcmp.eq.s32.totalorder %v1552, %v628
        %vm1576 = vcmp.eq.s32.totalorder %v1556, %v628
        %vm1577 = vcmp.eq.s32.totalorder %v1552, %v629
        %vm1578 = vcmp.eq.s32.totalorder %v1556, %v629
        %vm1579 = vcmp.eq.s32.totalorder %v1552, %v630
        %vm1580 = vcmp.eq.s32.totalorder %v1556, %v630
        %vm1581 = vcmp.eq.s32.totalorder %v1552, %v631
        %vm1582 = vcmp.eq.s32.totalorder %v1556, %v631
        %vm1583 = vcmp.eq.s32.totalorder %v1552, %v632
        %vm1584 = vcmp.eq.s32.totalorder %v1556, %v632
        %vm1585 = vcmp.eq.s32.totalorder %v1552, %v633
        %vm1586 = vcmp.eq.s32.totalorder %v1556, %v633
        %vm1587 = vcmp.eq.s32.totalorder %v1552, %v634
        %vm1588 = vcmp.eq.s32.totalorder %v1556, %v634
        %v1589 = vld [vmem:[#allocation3] sm:$0xff]
        %v1590 = vld [vmem:[#allocation3 + $0x8] sm:$0xff]
        %v1591 = vld [vmem:[#allocation3 + $0x10] sm:$0xff]
        %v1592 = vld [vmem:[#allocation3 + $0x18] sm:$0xff]
        %v1593 = vld [vmem:[#allocation3 + $0x20] sm:$0xff]
        %v1594 = vld [vmem:[#allocation3 + $0x28] sm:$0xff]
        %v1595 = vld [vmem:[#allocation3 + $0x30] sm:$0xff]
        %v1596 = vld [vmem:[#allocation3 + $0x38] sm:$0xff]
        %v1597 = vld [vmem:[#allocation3 + $0x40] sm:$0xff]
        %v1598 = vld [vmem:[#allocation3 + $0x48] sm:$0xff]
        %v1599 = vld [vmem:[#allocation3 + $0x50] sm:$0xff]
        %v1600 = vld [vmem:[#allocation3 + $0x58] sm:$0xff]
        %v1601 = vld [vmem:[#allocation3 + $0x60] sm:$0xff]
        %v1602 = vld [vmem:[#allocation3 + $0x68] sm:$0xff]
        %v1603 = vld [vmem:[#allocation3 + $0x70] sm:$0xff]
        %v1604 = vld [vmem:[#allocation3 + $0x78] sm:$0xff]
        %v1605 = vsel %vm1557, 1, 0
        %v1606 = vsel %vm1558, 1, 0
        %v1607 = vsel %vm1559, 1, 0
        %v1608 = vsel %vm1560, 1, 0
        %v1609 = vsel %vm1561, 1, 0
        %v1610 = vsel %vm1562, 1, 0
        %v1611 = vsel %vm1563, 1, 0
        %v1612 = vsel %vm1564, 1, 0
        %v1613 = vsel %vm1565, 1, 0
        %v1614 = vsel %vm1566, 1, 0
        %v1615 = vsel %vm1567, 1, 0
        %v1616 = vsel %vm1568, 1, 0
        %v1617 = vsel %vm1569, 1, 0
        %v1618 = vsel %vm1570, 1, 0
        %v1619 = vsel %vm1571, 1, 0
        %v1620 = vsel %vm1572, 1, 0
        %v1621 = vsel %vm1573, 1, 0
        %v1622 = vsel %vm1574, 1, 0
        %v1623 = vsel %vm1575, 1, 0
        %v1624 = vsel %vm1576, 1, 0
        %v1625 = vsel %vm1577, 1, 0
        %v1626 = vsel %vm1578, 1, 0
        %v1627 = vsel %vm1579, 1, 0
        %v1628 = vsel %vm1580, 1, 0
        %v1629 = vsel %vm1581, 1, 0
        %v1630 = vsel %vm1582, 1, 0
        %v1631 = vsel %vm1583, 1, 0
        %v1632 = vsel %vm1584, 1, 0
        %v1633 = vsel %vm1585, 1, 0
        %v1634 = vsel %vm1586, 1, 0
        %v1635 = vsel %vm1587, 1, 0
        %v1636 = vsel %vm1588, 1, 0
        %v1637 = vcvt.s32.f32 %v1605
        %v1638 = vcvt.s32.f32 %v1606
        %v1639 = vcvt.s32.f32 %v1607
        %v1640 = vcvt.s32.f32 %v1608
        %v1641 = vcvt.s32.f32 %v1609
        %v1642 = vcvt.s32.f32 %v1610
        %v1643 = vcvt.s32.f32 %v1611
        %v1644 = vcvt.s32.f32 %v1612
        %v1645 = vcvt.s32.f32 %v1613
        %v1646 = vcvt.s32.f32 %v1614
        %v1647 = vcvt.s32.f32 %v1615
        %v1648 = vcvt.s32.f32 %v1616
        %v1649 = vcvt.s32.f32 %v1617
        %v1650 = vcvt.s32.f32 %v1618
        %v1651 = vcvt.s32.f32 %v1619
        %v1652 = vcvt.s32.f32 %v1620
        %v1653 = vcvt.s32.f32 %v1621
        %v1654 = vcvt.s32.f32 %v1622
        %v1655 = vcvt.s32.f32 %v1623
        %v1656 = vcvt.s32.f32 %v1624
        %v1657 = vcvt.s32.f32 %v1625
        %v1658 = vcvt.s32.f32 %v1626
        %v1659 = vcvt.s32.f32 %v1627
        %v1660 = vcvt.s32.f32 %v1628
        %v1661 = vcvt.s32.f32 %v1629
        %v1662 = vcvt.s32.f32 %v1630
        %v1663 = vcvt.s32.f32 %v1631
        %v1664 = vcvt.s32.f32 %v1632
        %v1665 = vcvt.s32.f32 %v1633
        %v1666 = vcvt.s32.f32 %v1634
        %v1667 = vcvt.s32.f32 %v1635
        %v1668 = vcvt.s32.f32 %v1636
        %v1669 = vadd.f32 %v1637, %v1638
        %1670 = vadd.xlane.f32.xlu0 %v1669
        %v1671 = vpop.xlane.xlu0 %1670
        %v1672 = vadd.f32 %v1639, %v1640
        %1673 = vadd.xlane.f32.xlu0 %v1672
        %v1674 = vpop.xlane.xlu0 %1673
        %v1675 = vadd.f32 %v1641, %v1642
        %1676 = vadd.xlane.f32.xlu0 %v1675
        %v1677 = vpop.xlane.xlu0 %1676
        %v1678 = vadd.f32 %v1643, %v1644
        %1679 = vadd.xlane.f32.xlu0 %v1678
        %v1680 = vpop.xlane.xlu0 %1679
        %v1681 = vadd.f32 %v1645, %v1646
        %1682 = vadd.xlane.f32.xlu0 %v1681
        %v1683 = vpop.xlane.xlu0 %1682
        %v1684 = vadd.f32 %v1647, %v1648
        %1685 = vadd.xlane.f32.xlu0 %v1684
        %v1686 = vpop.xlane.xlu0 %1685
        %v1687 = vadd.f32 %v1649, %v1650
        %1688 = vadd.xlane.f32.xlu0 %v1687
        %v1689 = vpop.xlane.xlu0 %1688
        %v1690 = vadd.f32 %v1651, %v1652
        %1691 = vadd.xlane.f32.xlu0 %v1690
        %v1692 = vpop.xlane.xlu0 %1691
        %v1693 = vadd.f32 %v1653, %v1654
        %1694 = vadd.xlane.f32.xlu0 %v1693
        %v1695 = vpop.xlane.xlu0 %1694
        %v1696 = vadd.f32 %v1655, %v1656
        %1697 = vadd.xlane.f32.xlu0 %v1696
        %v1698 = vpop.xlane.xlu0 %1697
        %v1699 = vadd.f32 %v1657, %v1658
        %1700 = vadd.xlane.f32.xlu0 %v1699
        %v1701 = vpop.xlane.xlu0 %1700
        %v1702 = vadd.f32 %v1659, %v1660
        %1703 = vadd.xlane.f32.xlu0 %v1702
        %v1704 = vpop.xlane.xlu0 %1703
        %v1705 = vadd.f32 %v1661, %v1662
        %1706 = vadd.xlane.f32.xlu0 %v1705
        %v1707 = vpop.xlane.xlu0 %1706
        %v1708 = vadd.f32 %v1663, %v1664
        %1709 = vadd.xlane.f32.xlu0 %v1708
        %v1710 = vpop.xlane.xlu0 %1709
        %v1711 = vadd.f32 %v1665, %v1666
        %1712 = vadd.xlane.f32.xlu0 %v1711
        %v1713 = vpop.xlane.xlu0 %1712
        %v1714 = vadd.f32 %v1667, %v1668
        %1715 = vadd.xlane.f32.xlu0 %v1714
        %v1716 = vpop.xlane.xlu0 %1715
        %v1717 = vadd.f32 %v1589, %v1671
        %v1718 = vadd.f32 %v1590, %v1674
        %v1719 = vadd.f32 %v1591, %v1677
        %v1720 = vadd.f32 %v1592, %v1680
        %v1721 = vadd.f32 %v1593, %v1683
        %v1722 = vadd.f32 %v1594, %v1686
        %v1723 = vadd.f32 %v1595, %v1689
        %v1724 = vadd.f32 %v1596, %v1692
        %v1725 = vadd.f32 %v1597, %v1695
        %v1726 = vadd.f32 %v1598, %v1698
        %v1727 = vadd.f32 %v1599, %v1701
        %v1728 = vadd.f32 %v1600, %v1704
        %v1729 = vadd.f32 %v1601, %v1707
        %v1730 = vadd.f32 %v1602, %v1710
        %v1731 = vadd.f32 %v1603, %v1713
        %v1732 = vadd.f32 %v1604, %v1716
        %vm1733 = vcmask 7168
        %1734 = vst.msk [vmem:[#allocation3] sm:$0xff] %vm1733, %v1717
        %1735 = vst.msk [vmem:[#allocation3 + $0x8] sm:$0xff] %vm1733, %v1718
        %1736 = vst.msk [vmem:[#allocation3 + $0x10] sm:$0xff] %vm1733, %v1719
        %1737 = vst.msk [vmem:[#allocation3 + $0x18] sm:$0xff] %vm1733, %v1720
        %1738 = vst.msk [vmem:[#allocation3 + $0x20] sm:$0xff] %vm1733, %v1721
        %1739 = vst.msk [vmem:[#allocation3 + $0x28] sm:$0xff] %vm1733, %v1722
        %1740 = vst.msk [vmem:[#allocation3 + $0x30] sm:$0xff] %vm1733, %v1723
        %1741 = vst.msk [vmem:[#allocation3 + $0x38] sm:$0xff] %vm1733, %v1724
        %1742 = vst.msk [vmem:[#allocation3 + $0x40] sm:$0xff] %vm1733, %v1725
        %1743 = vst.msk [vmem:[#allocation3 + $0x48] sm:$0xff] %vm1733, %v1726
        %1744 = vst.msk [vmem:[#allocation3 + $0x50] sm:$0xff] %vm1733, %v1727
        %1745 = vst.msk [vmem:[#allocation3 + $0x58] sm:$0xff] %vm1733, %v1728
        %1746 = vst.msk [vmem:[#allocation3 + $0x60] sm:$0xff] %vm1733, %v1729
        %1747 = vst.msk [vmem:[#allocation3 + $0x68] sm:$0xff] %vm1733, %v1730
        %1748 = vst.msk [vmem:[#allocation3 + $0x70] sm:$0xff] %vm1733, %v1731
        %1749 = vst.msk [vmem:[#allocation3 + $0x78] sm:$0xff] %vm1733, %v1732
        %p1750 = scmp.eq.s32.totalorder %s29, 1
        // Predicated region
        $region57: #{tpu_custom_call.1} parent=51 // pred_check
          %p1751 = pneg %p1750
        $region58: #{tpu_custom_call.1} parent=51 // pred_check_branch
          %1753 = sbr.rel (%p1751) target = $region60
        $region59: #{tpu_custom_call.1} parent=51 // pred_region
          %v1754 = vld [vmem:[#allocation2] sm:$0x3]
          %v1755 = vadd.f32 %v1754, 1.0
          %v1756 = vrsqrt.pop %v1755
          %v1757 = vld [vmem:[#allocation3] sm:$0xff]
          %v1758 = vld [vmem:[#allocation3 + $0x8] sm:$0xff]
          %v1759 = vld [vmem:[#allocation3 + $0x10] sm:$0xff]
          %v1760 = vld [vmem:[#allocation3 + $0x18] sm:$0xff]
          %v1761 = vld [vmem:[#allocation3 + $0x20] sm:$0xff]
          %v1762 = vld [vmem:[#allocation3 + $0x28] sm:$0xff]
          %v1763 = vld [vmem:[#allocation3 + $0x30] sm:$0xff]
          %v1764 = vld [vmem:[#allocation3 + $0x38] sm:$0xff]
          %v1765 = vld [vmem:[#allocation3 + $0x40] sm:$0xff]
          %v1766 = vld [vmem:[#allocation3 + $0x48] sm:$0xff]
          %v1767 = vld [vmem:[#allocation3 + $0x50] sm:$0xff]
          %v1768 = vld [vmem:[#allocation3 + $0x58] sm:$0xff]
          %v1769 = vld [vmem:[#allocation3 + $0x60] sm:$0xff]
          %v1770 = vld [vmem:[#allocation3 + $0x68] sm:$0xff]
          %v1771 = vld [vmem:[#allocation3 + $0x70] sm:$0xff]
          %v1772 = vld [vmem:[#allocation3 + $0x78] sm:$0xff]
          %v1773 = vadd.f32 %v1757, 1.0
          %v1774 = vadd.f32 %v1758, 1.0
          %v1775 = vadd.f32 %v1759, 1.0
          %v1776 = vadd.f32 %v1760, 1.0
          %v1777 = vadd.f32 %v1761, 1.0
          %v1778 = vadd.f32 %v1762, 1.0
          %v1779 = vadd.f32 %v1763, 1.0
          %v1780 = vadd.f32 %v1764, 1.0
          %v1781 = vadd.f32 %v1765, 1.0
          %v1782 = vadd.f32 %v1766, 1.0
          %v1783 = vadd.f32 %v1767, 1.0
          %v1784 = vadd.f32 %v1768, 1.0
          %v1785 = vadd.f32 %v1769, 1.0
          %v1786 = vadd.f32 %v1770, 1.0
          %v1787 = vadd.f32 %v1771, 1.0
          %v1788 = vadd.f32 %v1772, 1.0
          %v1789 = vrsqrt.pop %v1773
          %v1790 = vrsqrt.pop %v1774
          %v1791 = vrsqrt.pop %v1775
          %v1792 = vrsqrt.pop %v1776
          %v1793 = vrsqrt.pop %v1777
          %v1794 = vrsqrt.pop %v1778
          %v1795 = vrsqrt.pop %v1779
          %v1796 = vrsqrt.pop %v1780
          %v1797 = vrsqrt.pop %v1781
          %v1798 = vrsqrt.pop %v1782
          %v1799 = vrsqrt.pop %v1783
          %v1800 = vrsqrt.pop %v1784
          %v1801 = vrsqrt.pop %v1785
          %v1802 = vrsqrt.pop %v1786
          %v1803 = vrsqrt.pop %v1787
          %v1804 = vrsqrt.pop %v1788
          %v1805 = vld [vmem:[%s355] sm:$0xff]
          %v1806 = vld [vmem:[%s355 + $0x8] sm:$0xff]
          %v1807 = vld [vmem:[%s355 + $0x10] sm:$0xff]
          %v1808 = vld [vmem:[%s355 + $0x18] sm:$0xff]
          %v1809 = vld [vmem:[%s355 + $0x20] sm:$0xff]
          %v1810 = vld [vmem:[%s355 + $0x28] sm:$0xff]
          %v1811 = vld [vmem:[%s355 + $0x30] sm:$0xff]
          %v1812 = vld [vmem:[%s355 + $0x38] sm:$0xff]
          %v1813 = vld [vmem:[%s355 + $0x40] sm:$0xff]
          %v1814 = vld [vmem:[%s355 + $0x48] sm:$0xff]
          %v1815 = vld [vmem:[%s355 + $0x50] sm:$0xff]
          %v1816 = vld [vmem:[%s355 + $0x58] sm:$0xff]
          %v1817 = vld [vmem:[%s355 + $0x60] sm:$0xff]
          %v1818 = vld [vmem:[%s355 + $0x68] sm:$0xff]
          %v1819 = vld [vmem:[%s355 + $0x70] sm:$0xff]
          %v1820 = vld [vmem:[%s355 + $0x78] sm:$0xff]
          %v1821 = vld [vmem:[%s355 + $0x80] sm:$0xff]
          %v1822 = vld [vmem:[%s355 + $0x88] sm:$0xff]
          %v1823 = vld [vmem:[%s355 + $0x90] sm:$0xff]
          %v1824 = vld [vmem:[%s355 + $0x98] sm:$0xff]
          %v1825 = vld [vmem:[%s355 + $0xa0] sm:$0xff]
          %v1826 = vld [vmem:[%s355 + $0xa8] sm:$0xff]
          %v1827 = vld [vmem:[%s355 + $0xb0] sm:$0xff]
          %v1828 = vld [vmem:[%s355 + $0xb8] sm:$0xff]
          %v1829 = vld [vmem:[%s355 + $0xc0] sm:$0xff]
          %v1830 = vld [vmem:[%s355 + $0xc8] sm:$0xff]
          %v1831 = vld [vmem:[%s355 + $0xd0] sm:$0xff]
          %v1832 = vld [vmem:[%s355 + $0xd8] sm:$0xff]
          %v1833 = vld [vmem:[%s355 + $0xe0] sm:$0xff]
          %v1834 = vld [vmem:[%s355 + $0xe8] sm:$0xff]
          %v1835 = vld [vmem:[%s355 + $0xf0] sm:$0xff]
          %v1836 = vld [vmem:[%s355 + $0xf8] sm:$0xff]
          %v1838 = vlaneseq
          %v1839 = vshrl.u32 %v1838, 7
          %v1840 = vsub.s32 0, %v1839
          %v1841 = vrot.slane %v1756, %v1840
          %v1842 = vlaneseq
          %v1843 = vshrl.u32 %v1842, 7
          %v1844 = vsub.s32 1, %v1843
          %v1845 = vrot.slane %v1756, %v1844
          %v1848 = vmul.f32 %v1805, %v1841
          %v1849 = vmul.f32 %v1806, %v1845
          %v1850 = vmul.f32 %v1807, %v1841
          %v1851 = vmul.f32 %v1808, %v1845
          %v1852 = vmul.f32 %v1809, %v1841
          %v1853 = vmul.f32 %v1810, %v1845
          %v1854 = vmul.f32 %v1811, %v1841
          %v1855 = vmul.f32 %v1812, %v1845
          %v1856 = vmul.f32 %v1813, %v1841
          %v1857 = vmul.f32 %v1814, %v1845
          %v1858 = vmul.f32 %v1815, %v1841
          %v1859 = vmul.f32 %v1816, %v1845
          %v1860 = vmul.f32 %v1817, %v1841
          %v1861 = vmul.f32 %v1818, %v1845
          %v1862 = vmul.f32 %v1819, %v1841
          %v1863 = vmul.f32 %v1820, %v1845
          %v1864 = vmul.f32 %v1821, %v1841
          %v1865 = vmul.f32 %v1822, %v1845
          %v1866 = vmul.f32 %v1823, %v1841
          %v1867 = vmul.f32 %v1824, %v1845
          %v1868 = vmul.f32 %v1825, %v1841
          %v1869 = vmul.f32 %v1826, %v1845
          %v1870 = vmul.f32 %v1827, %v1841
          %v1871 = vmul.f32 %v1828, %v1845
          %v1872 = vmul.f32 %v1829, %v1841
          %v1873 = vmul.f32 %v1830, %v1845
          %v1874 = vmul.f32 %v1831, %v1841
          %v1875 = vmul.f32 %v1832, %v1845
          %v1876 = vmul.f32 %v1833, %v1841
          %v1877 = vmul.f32 %v1834, %v1845
          %v1878 = vmul.f32 %v1835, %v1841
          %v1879 = vmul.f32 %v1836, %v1845
          %1881 = vset.pattern.permute.xlu0 0
          %1882 = vperm.xlu0 %1881, %v1789
          %v1883 = vpop.permute.xlu0 %1882
          %1886 = vset.pattern.permute.xlu0 0
          %1887 = vperm.xlu0 %1886, %v1790
          %v1888 = vpop.permute.xlu0 %1887
          %1891 = vset.pattern.permute.xlu0 0
          %1892 = vperm.xlu0 %1891, %v1791
          %v1893 = vpop.permute.xlu0 %1892
          %1896 = vset.pattern.permute.xlu0 0
          %1897 = vperm.xlu0 %1896, %v1792
          %v1898 = vpop.permute.xlu0 %1897
          %1901 = vset.pattern.permute.xlu0 0
          %1902 = vperm.xlu0 %1901, %v1793
          %v1903 = vpop.permute.xlu0 %1902
          %1906 = vset.pattern.permute.xlu0 0
          %1907 = vperm.xlu0 %1906, %v1794
          %v1908 = vpop.permute.xlu0 %1907
          %1911 = vset.pattern.permute.xlu0 0
          %1912 = vperm.xlu0 %1911, %v1795
          %v1913 = vpop.permute.xlu0 %1912
          %1916 = vset.pattern.permute.xlu0 0
          %1917 = vperm.xlu0 %1916, %v1796
          %v1918 = vpop.permute.xlu0 %1917
          %1921 = vset.pattern.permute.xlu0 0
          %1922 = vperm.xlu0 %1921, %v1797
          %v1923 = vpop.permute.xlu0 %1922
          %1926 = vset.pattern.permute.xlu0 0
          %1927 = vperm.xlu0 %1926, %v1798
          %v1928 = vpop.permute.xlu0 %1927
          %1931 = vset.pattern.permute.xlu0 0
          %1932 = vperm.xlu0 %1931, %v1799
          %v1933 = vpop.permute.xlu0 %1932
          %1936 = vset.pattern.permute.xlu0 0
          %1937 = vperm.xlu0 %1936, %v1800
          %v1938 = vpop.permute.xlu0 %1937
          %1941 = vset.pattern.permute.xlu0 0
          %1942 = vperm.xlu0 %1941, %v1801
          %v1943 = vpop.permute.xlu0 %1942
          %1946 = vset.pattern.permute.xlu0 0
          %1947 = vperm.xlu0 %1946, %v1802
          %v1948 = vpop.permute.xlu0 %1947
          %1951 = vset.pattern.permute.xlu0 0
          %1952 = vperm.xlu0 %1951, %v1803
          %v1953 = vpop.permute.xlu0 %1952
          %1956 = vset.pattern.permute.xlu0 0
          %1957 = vperm.xlu0 %1956, %v1804
          %v1958 = vpop.permute.xlu0 %1957
          %v1960 = vmul.f32 %v1848, %v1883
          %v1961 = vmul.f32 %v1849, %v1883
          %v1962 = vmul.f32 %v1850, %v1888
          %v1963 = vmul.f32 %v1851, %v1888
          %v1964 = vmul.f32 %v1852, %v1893
          %v1965 = vmul.f32 %v1853, %v1893
          %v1966 = vmul.f32 %v1854, %v1898
          %v1967 = vmul.f32 %v1855, %v1898
          %v1968 = vmul.f32 %v1856, %v1903
          %v1969 = vmul.f32 %v1857, %v1903
          %v1970 = vmul.f32 %v1858, %v1908
          %v1971 = vmul.f32 %v1859, %v1908
          %v1972 = vmul.f32 %v1860, %v1913
          %v1973 = vmul.f32 %v1861, %v1913
          %v1974 = vmul.f32 %v1862, %v1918
          %v1975 = vmul.f32 %v1863, %v1918
          %v1976 = vmul.f32 %v1864, %v1923
          %v1977 = vmul.f32 %v1865, %v1923
          %v1978 = vmul.f32 %v1866, %v1928
          %v1979 = vmul.f32 %v1867, %v1928
          %v1980 = vmul.f32 %v1868, %v1933
          %v1981 = vmul.f32 %v1869, %v1933
          %v1982 = vmul.f32 %v1870, %v1938
          %v1983 = vmul.f32 %v1871, %v1938
          %v1984 = vmul.f32 %v1872, %v1943
          %v1985 = vmul.f32 %v1873, %v1943
          %v1986 = vmul.f32 %v1874, %v1948
          %v1987 = vmul.f32 %v1875, %v1948
          %v1988 = vmul.f32 %v1876, %v1953
          %v1989 = vmul.f32 %v1877, %v1953
          %v1990 = vmul.f32 %v1878, %v1958
          %v1991 = vmul.f32 %v1879, %v1958
          %v1992 = vmul.f32 %v1789, %v1789
          %v1993 = vmul.f32 %v1790, %v1790
          %v1994 = vmul.f32 %v1791, %v1791
          %v1995 = vmul.f32 %v1792, %v1792
          %v1996 = vmul.f32 %v1793, %v1793
          %v1997 = vmul.f32 %v1794, %v1794
          %v1998 = vmul.f32 %v1795, %v1795
          %v1999 = vmul.f32 %v1796, %v1796
          %v2000 = vmul.f32 %v1797, %v1797
          %v2001 = vmul.f32 %v1798, %v1798
          %v2002 = vmul.f32 %v1799, %v1799
          %v2003 = vmul.f32 %v1800, %v1800
          %v2004 = vmul.f32 %v1801, %v1801
          %v2005 = vmul.f32 %v1802, %v1802
          %v2006 = vmul.f32 %v1803, %v1803
          %v2007 = vmul.f32 %v1804, %v1804
          %v2008 = vsub.f32 1.0, %v1992
          %v2009 = vsub.f32 1.0, %v1993
          %v2010 = vsub.f32 1.0, %v1994
          %v2011 = vsub.f32 1.0, %v1995
          %v2012 = vsub.f32 1.0, %v1996
          %v2013 = vsub.f32 1.0, %v1997
          %v2014 = vsub.f32 1.0, %v1998
          %v2015 = vsub.f32 1.0, %v1999
          %v2016 = vsub.f32 1.0, %v2000
          %v2017 = vsub.f32 1.0, %v2001
          %v2018 = vsub.f32 1.0, %v2002
          %v2019 = vsub.f32 1.0, %v2003
          %v2020 = vsub.f32 1.0, %v2004
          %v2021 = vsub.f32 1.0, %v2005
          %v2022 = vsub.f32 1.0, %v2006
          %v2023 = vsub.f32 1.0, %v2007
          %vm2024 = vcmp.eq.s32.totalorder %v619, %v773
          %vm2025 = vcmp.eq.s32.totalorder %v619, %v774
          %vm2026 = vcmp.eq.s32.totalorder %v620, %v773
          %vm2027 = vcmp.eq.s32.totalorder %v620, %v774
          %vm2028 = vcmp.eq.s32.totalorder %v621, %v773
          %vm2029 = vcmp.eq.s32.totalorder %v621, %v774
          %vm2030 = vcmp.eq.s32.totalorder %v622, %v773
          %vm2031 = vcmp.eq.s32.totalorder %v622, %v774
          %vm2032 = vcmp.eq.s32.totalorder %v623, %v773
          %vm2033 = vcmp.eq.s32.totalorder %v623, %v774
          %vm2034 = vcmp.eq.s32.totalorder %v624, %v773
          %vm2035 = vcmp.eq.s32.totalorder %v624, %v774
          %vm2036 = vcmp.eq.s32.totalorder %v625, %v773
          %vm2037 = vcmp.eq.s32.totalorder %v625, %v774
          %vm2038 = vcmp.eq.s32.totalorder %v626, %v773
          %vm2039 = vcmp.eq.s32.totalorder %v626, %v774
          %vm2040 = vcmp.eq.s32.totalorder %v627, %v773
          %vm2041 = vcmp.eq.s32.totalorder %v627, %v774
          %vm2042 = vcmp.eq.s32.totalorder %v628, %v773
          %vm2043 = vcmp.eq.s32.totalorder %v628, %v774
          %vm2044 = vcmp.eq.s32.totalorder %v629, %v773
          %vm2045 = vcmp.eq.s32.totalorder %v629, %v774
          %vm2046 = vcmp.eq.s32.totalorder %v630, %v773
          %vm2047 = vcmp.eq.s32.totalorder %v630, %v774
          %vm2048 = vcmp.eq.s32.totalorder %v631, %v773
          %vm2049 = vcmp.eq.s32.totalorder %v631, %v774
          %vm2050 = vcmp.eq.s32.totalorder %v632, %v773
          %vm2051 = vcmp.eq.s32.totalorder %v632, %v774
          %vm2052 = vcmp.eq.s32.totalorder %v633, %v773
          %vm2053 = vcmp.eq.s32.totalorder %v633, %v774
          %vm2054 = vcmp.eq.s32.totalorder %v634, %v773
          %vm2055 = vcmp.eq.s32.totalorder %v634, %v774
          %2057 = vset.pattern.permute.xlu0 0
          %2058 = vperm.xlu0 %2057, %v2008
          %v2059 = vpop.permute.xlu0 %2058
          %2062 = vset.pattern.permute.xlu0 0
          %2063 = vperm.xlu0 %2062, %v2009
          %v2064 = vpop.permute.xlu0 %2063
          %2067 = vset.pattern.permute.xlu0 0
          %2068 = vperm.xlu0 %2067, %v2010
          %v2069 = vpop.permute.xlu0 %2068
          %2072 = vset.pattern.permute.xlu0 0
          %2073 = vperm.xlu0 %2072, %v2011
          %v2074 = vpop.permute.xlu0 %2073
          %2077 = vset.pattern.permute.xlu0 0
          %2078 = vperm.xlu0 %2077, %v2012
          %v2079 = vpop.permute.xlu0 %2078
          %2082 = vset.pattern.permute.xlu0 0
          %2083 = vperm.xlu0 %2082, %v2013
          %v2084 = vpop.permute.xlu0 %2083
          %2087 = vset.pattern.permute.xlu0 0
          %2088 = vperm.xlu0 %2087, %v2014
          %v2089 = vpop.permute.xlu0 %2088
          %2092 = vset.pattern.permute.xlu0 0
          %2093 = vperm.xlu0 %2092, %v2015
          %v2094 = vpop.permute.xlu0 %2093
          %2097 = vset.pattern.permute.xlu0 0
          %2098 = vperm.xlu0 %2097, %v2016
          %v2099 = vpop.permute.xlu0 %2098
          %2102 = vset.pattern.permute.xlu0 0
          %2103 = vperm.xlu0 %2102, %v2017
          %v2104 = vpop.permute.xlu0 %2103
          %2107 = vset.pattern.permute.xlu0 0
          %2108 = vperm.xlu0 %2107, %v2018
          %v2109 = vpop.permute.xlu0 %2108
          %2112 = vset.pattern.permute.xlu0 0
          %2113 = vperm.xlu0 %2112, %v2019
          %v2114 = vpop.permute.xlu0 %2113
          %2117 = vset.pattern.permute.xlu0 0
          %2118 = vperm.xlu0 %2117, %v2020
          %v2119 = vpop.permute.xlu0 %2118
          %2122 = vset.pattern.permute.xlu0 0
          %2123 = vperm.xlu0 %2122, %v2021
          %v2124 = vpop.permute.xlu0 %2123
          %2127 = vset.pattern.permute.xlu0 0
          %2128 = vperm.xlu0 %2127, %v2022
          %v2129 = vpop.permute.xlu0 %2128
          %2132 = vset.pattern.permute.xlu0 0
          %2133 = vperm.xlu0 %2132, %v2023
          %v2134 = vpop.permute.xlu0 %2133
          %v2136 = vsel %vm2024, %v2059, 0.0
          %v2137 = vsel %vm2025, %v2059, 0.0
          %v2138 = vsel %vm2026, %v2064, 0.0
          %v2139 = vsel %vm2027, %v2064, 0.0
          %v2140 = vsel %vm2028, %v2069, 0.0
          %v2141 = vsel %vm2029, %v2069, 0.0
          %v2142 = vsel %vm2030, %v2074, 0.0
          %v2143 = vsel %vm2031, %v2074, 0.0
          %v2144 = vsel %vm2032, %v2079, 0.0
          %v2145 = vsel %vm2033, %v2079, 0.0
          %v2146 = vsel %vm2034, %v2084, 0.0
          %v2147 = vsel %vm2035, %v2084, 0.0
          %v2148 = vsel %vm2036, %v2089, 0.0
          %v2149 = vsel %vm2037, %v2089, 0.0
          %v2150 = vsel %vm2038, %v2094, 0.0
          %v2151 = vsel %vm2039, %v2094, 0.0
          %v2152 = vsel %vm2040, %v2099, 0.0
          %v2153 = vsel %vm2041, %v2099, 0.0
          %v2154 = vsel %vm2042, %v2104, 0.0
          %v2155 = vsel %vm2043, %v2104, 0.0
          %v2156 = vsel %vm2044, %v2109, 0.0
          %v2157 = vsel %vm2045, %v2109, 0.0
          %v2158 = vsel %vm2046, %v2114, 0.0
          %v2159 = vsel %vm2047, %v2114, 0.0
          %v2160 = vsel %vm2048, %v2119, 0.0
          %v2161 = vsel %vm2049, %v2119, 0.0
          %v2162 = vsel %vm2050, %v2124, 0.0
          %v2163 = vsel %vm2051, %v2124, 0.0
          %v2164 = vsel %vm2052, %v2129, 0.0
          %v2165 = vsel %vm2053, %v2129, 0.0
          %v2166 = vsel %vm2054, %v2134, 0.0
          %v2167 = vsel %vm2055, %v2134, 0.0
          %v2168 = vsub.f32 %v2136, %v1960
          %v2169 = vsub.f32 %v2137, %v1961
          %v2170 = vsub.f32 %v2138, %v1962
          %v2171 = vsub.f32 %v2139, %v1963
          %v2172 = vsub.f32 %v2140, %v1964
          %v2173 = vsub.f32 %v2141, %v1965
          %v2174 = vsub.f32 %v2142, %v1966
          %v2175 = vsub.f32 %v2143, %v1967
          %v2176 = vsub.f32 %v2144, %v1968
          %v2177 = vsub.f32 %v2145, %v1969
          %v2178 = vsub.f32 %v2146, %v1970
          %v2179 = vsub.f32 %v2147, %v1971
          %v2180 = vsub.f32 %v2148, %v1972
          %v2181 = vsub.f32 %v2149, %v1973
          %v2182 = vsub.f32 %v2150, %v1974
          %v2183 = vsub.f32 %v2151, %v1975
          %v2184 = vsub.f32 %v2152, %v1976
          %v2185 = vsub.f32 %v2153, %v1977
          %v2186 = vsub.f32 %v2154, %v1978
          %v2187 = vsub.f32 %v2155, %v1979
          %v2188 = vsub.f32 %v2156, %v1980
          %v2189 = vsub.f32 %v2157, %v1981
          %v2190 = vsub.f32 %v2158, %v1982
          %v2191 = vsub.f32 %v2159, %v1983
          %v2192 = vsub.f32 %v2160, %v1984
          %v2193 = vsub.f32 %v2161, %v1985
          %v2194 = vsub.f32 %v2162, %v1986
          %v2195 = vsub.f32 %v2163, %v1987
          %v2196 = vsub.f32 %v2164, %v1988
          %v2197 = vsub.f32 %v2165, %v1989
          %v2198 = vsub.f32 %v2166, %v1990
          %v2199 = vsub.f32 %v2167, %v1991
          %2200 = vst [vmem:[%s355] sm:$0xff] %v2168
          %2201 = vst [vmem:[%s355 + $0x8] sm:$0xff] %v2169
          %2202 = vst [vmem:[%s355 + $0x10] sm:$0xff] %v2170
          %2203 = vst [vmem:[%s355 + $0x18] sm:$0xff] %v2171
          %2204 = vst [vmem:[%s355 + $0x20] sm:$0xff] %v2172
          %2205 = vst [vmem:[%s355 + $0x28] sm:$0xff] %v2173
          %2206 = vst [vmem:[%s355 + $0x30] sm:$0xff] %v2174
          %2207 = vst [vmem:[%s355 + $0x38] sm:$0xff] %v2175
          %2208 = vst [vmem:[%s355 + $0x40] sm:$0xff] %v2176
          %2209 = vst [vmem:[%s355 + $0x48] sm:$0xff] %v2177
          %2210 = vst [vmem:[%s355 + $0x50] sm:$0xff] %v2178
          %2211 = vst [vmem:[%s355 + $0x58] sm:$0xff] %v2179
          %2212 = vst [vmem:[%s355 + $0x60] sm:$0xff] %v2180
          %2213 = vst [vmem:[%s355 + $0x68] sm:$0xff] %v2181
          %2214 = vst [vmem:[%s355 + $0x70] sm:$0xff] %v2182
          %2215 = vst [vmem:[%s355 + $0x78] sm:$0xff] %v2183
          %2216 = vst [vmem:[%s355 + $0x80] sm:$0xff] %v2184
          %2217 = vst [vmem:[%s355 + $0x88] sm:$0xff] %v2185
          %2218 = vst [vmem:[%s355 + $0x90] sm:$0xff] %v2186
          %2219 = vst [vmem:[%s355 + $0x98] sm:$0xff] %v2187
          %2220 = vst [vmem:[%s355 + $0xa0] sm:$0xff] %v2188
          %2221 = vst [vmem:[%s355 + $0xa8] sm:$0xff] %v2189
          %2222 = vst [vmem:[%s355 + $0xb0] sm:$0xff] %v2190
          %2223 = vst [vmem:[%s355 + $0xb8] sm:$0xff] %v2191
          %2224 = vst [vmem:[%s355 + $0xc0] sm:$0xff] %v2192
          %2225 = vst [vmem:[%s355 + $0xc8] sm:$0xff] %v2193
          %2226 = vst [vmem:[%s355 + $0xd0] sm:$0xff] %v2194
          %2227 = vst [vmem:[%s355 + $0xd8] sm:$0xff] %v2195
          %2228 = vst [vmem:[%s355 + $0xe0] sm:$0xff] %v2196
          %2229 = vst [vmem:[%s355 + $0xe8] sm:$0xff] %v2197
          %2230 = vst [vmem:[%s355 + $0xf0] sm:$0xff] %v2198
          %2231 = vst [vmem:[%s355 + $0xf8] sm:$0xff] %v2199
        $region60: #{tpu_custom_call.1} parent=51 // pred_fallthru
          _
        %s2232 = sand.u32 %s232, 1
        %s2233 = scalar_lea.sflag [#allocation6], %s2232
        %s2234 = sand.u32 %s232, 1
        %s2235 = smul.addr %s2234, 256
        %s2236 = scalar_lea.vmem [#allocation5], %s2235
        // Predicated region
        $region61: #{tpu_custom_call.1} parent=51 // pred_check
          %p2237 = pneg %p242
        $region62: #{tpu_custom_call.1} parent=51 // pred_check_branch
          %2239 = sbr.rel (%p2237) target = $region64
        $region63: #{tpu_custom_call.1} parent=51 // pred_region
          %s2240 = smul.u32 16, %s28
          %s2242 = ssub.s32 4096, 4096
          %2243 = vsyncadd %s2233, %s2242
          %s2244 = smul.addr %s2240, 2
          %s2245 = smul.addr %s2244, 128
          %s2246 = scalar_lea.hbm %s8, %s2245
          %s2247 = sshll.u32 %s2236, 4
          %s2248 = int_to_ptr.vmem [resolvable:$true] %s2247
          %2253 = dma.vmem_to_hbm [thread:$0]  %s2248, 4096, %s2246, %s2233, 256, 256, 16
        $region64: #{tpu_custom_call.1} parent=51 // pred_fallthru
          _
      $region52: #{tpu_custom_call.1} parent=5 // pred_fallthru
        _
      %p2254 = scmp.le.s32.totalorder 2, %s19
      // Predicated region
      $region65: #{tpu_custom_call.1} parent=5 // pred_check
        %p2255 = pneg %p2254
      $region66: #{tpu_custom_call.1} parent=5 // pred_check_branch
        %2257 = sbr.rel (%p2255) target = $region68
      $region67: #{tpu_custom_call.1} parent=5 // pred_region
        %s2258 = ssub.s32 %s19, 2
        // Predicated region
        $region69: #{tpu_custom_call.1} parent=67 // pred_check
          %p2259 = pneg %p248
        $region70: #{tpu_custom_call.1} parent=67 // pred_check_branch
          %2261 = sbr.rel (%p2259) target = $region72
        $region71: #{tpu_custom_call.1} parent=67 // pred_region
          %s2262 = sand.u32 %s233, 1
          %s2263 = scalar_lea.sflag [#allocation6], %s2262
          %s2264 = sand.u32 %s233, 1
          %s2265 = smul.addr %s2264, 256
          %s2266 = scalar_lea.vmem [#allocation5], %s2265
          %2267 = dma.done %s2263, 4096
        $region72: #{tpu_custom_call.1} parent=67 // pred_fallthru
          _
      $region68: #{tpu_custom_call.1} parent=5 // pred_fallthru
        _
    $region6: #{tpu_custom_call.1} parent=1 // loop_footer
      %s23 = sadd.s32 1, %s19
    $region7: #{tpu_custom_call.1} parent=1 // loop_footer_branch
      %18 = sbr.rel target = $region3
    $region8: #{tpu_custom_call.1} parent=1 // loop_exit
      _
    %2268 = vsyncpa [#allocation6], 1
    %s2269 = scalar_lea.sflag [#allocation6], 1
    %2270 = vsyncpa %s2269, 1

</llo_original>
